<compile_context>
chip_gen: v7x
topology: tpu7x:2x2x1
jax: 0.10.0
libtpu: 0.0.40
codegen_flags: <defaults>
</compile_context>

<pallas_src>
import functools

import jax
import jax.numpy as jnp
import numpy as np
from jax.experimental import pallas as pl
from jax.experimental.pallas import tpu as pltpu


# ---------------------------------------------------------------------------
# Kernel: batched LSTM unroll + output Linear, whole batch block per grid step
# ---------------------------------------------------------------------------
def lstm_linear_kernel(x_ref, wih_ref, whh_ref, b_ref, wlin_ref, blin_ref,
                       o_ref, *, batch, hidden, seq_len):
    """Fused LSTM + Linear for one batch block.

    x_ref:    (B*T, In)   flattened batch-major input
    wih_ref:  (In, 4H)    input->gate weights, i/f/o columns pre-scaled by 0.5
    whh_ref:  (H, 4H)     hidden->gate weights, i/f/o columns pre-scaled by 0.5
    b_ref:    (1, 4H)     b_ih+b_hh, i/f/o lanes pre-scaled by 0.5
    wlin_ref: (H, In)     output Linear weight (transposed)
    blin_ref: (1, In)     output Linear bias
    o_ref:    (B*T, In)   flattened output
    Gate order along the 4H axis is PyTorch's (i, f, g, o).
    """
    B, H, T = batch, hidden, seq_len
    f32 = jnp.float32

    # (1) Input projection for ALL (b, t): one lane-dense MXU matmul.
    gx = jnp.dot(x_ref[...], wih_ref[...], preferred_element_type=f32) + b_ref[...]
    gx = gx.reshape(B, T, 4 * H)          # sublane split only; minor dim untouched
    whh = whh_ref[...]

    # Per-lane affine that turns a single tanh into all four gate
    # nonlinearities (weights already carry the /2 for the sigmoid lanes):
    #   i/f/o lanes: 0.5*tanh(z/2) + 0.5 == sigmoid(z)     g lanes: tanh(z)
    lane = jax.lax.broadcasted_iota(jnp.int32, (1, 4 * H), 1)
    is_g = (lane >= 2 * H) & (lane < 3 * H)
    aff_a = jnp.where(is_g, f32(1.0), f32(0.5))
    aff_b = jnp.where(is_g, f32(0.0), f32(0.5))

    # (2) Sequential recurrence, batched over B, statically unrolled over T.
    h = jnp.zeros((B, H), f32)
    c = jnp.zeros((B, H), f32)
    hs = []
    for t in range(T):
        z = gx[:, t, :] + jnp.dot(h, whh, preferred_element_type=f32)   # (B, 4H)
        y = jnp.tanh(z) * aff_a + aff_b        # one EUP pass for all four gates
        i_g = y[:, 0 * H:1 * H]
        f_g = y[:, 1 * H:2 * H]
        g_g = y[:, 2 * H:3 * H]
        o_g = y[:, 3 * H:4 * H]
        c = f_g * c + i_g * g_g
        h = o_g * jnp.tanh(c)
        hs.append(h)

    # (3) Output Linear for ALL (b, t): one MXU matmul over the vreg-resident
    #     hidden-state history (no VMEM scratch round trip).
    h_all = jnp.stack(hs, axis=1).reshape(B * T, H)                     # (B*T, H)
    out = jnp.dot(h_all, wlin_ref[...], preferred_element_type=f32) + blin_ref[...]
    o_ref[...] = out.astype(o_ref.dtype)


# ---------------------------------------------------------------------------
# Wrapper: one fused pallas_call for the whole forward pass
# ---------------------------------------------------------------------------
def forecast_net_forward(prepared, x, *, batch_block=None):
    """x: (B, T, in_features) float32 -> (B, T, in_features) float32."""
    B, T, In = x.shape
    H = prepared["whh_t"].shape[0]
    if batch_block is None:
        batch_block = B                  # whole batch in one block / one grid step
    assert B % batch_block == 0, (B, batch_block)

    kern = functools.partial(lstm_linear_kernel,
                             batch=batch_block, hidden=H, seq_len=T)
    out2 = pl.pallas_call(
        kern,
        out_shape=jax.ShapeDtypeStruct((B * T, In), jnp.float32),
        grid=(pl.cdiv(B, batch_block),),
        in_specs=[
            pl.BlockSpec((batch_block * T, In), lambda b: (b, 0)),
            pl.BlockSpec((In, 4 * H), lambda b: (0, 0)),
            pl.BlockSpec((H, 4 * H), lambda b: (0, 0)),
            pl.BlockSpec((1, 4 * H), lambda b: (0, 0)),
            pl.BlockSpec((H, In), lambda b: (0, 0)),
            pl.BlockSpec((1, In), lambda b: (0, 0)),
        ],
        out_specs=pl.BlockSpec((batch_block * T, In), lambda b: (b, 0)),
        compiler_params=pltpu.CompilerParams(dimension_semantics=("parallel",)),
    )(x.astype(jnp.float32).reshape(B * T, In),
      prepared["wih_t"], prepared["whh_t"], prepared["bias"],
      prepared["wlin_t"], prepared["blin"])
    return out2.reshape(B, T, In)


# ---------------------------------------------------------------------------
# Parameters (PyTorch-style uniform(-1/sqrt(H), 1/sqrt(H)) init) + one-time prep
# ---------------------------------------------------------------------------
def init_forecast_net_params(key, in_features, hidden_size):
    bound = 1.0 / (hidden_size ** 0.5)
    ks = jax.random.split(key, 6)
    u = lambda kk, shape: jax.random.uniform(kk, shape, jnp.float32, -bound, bound)
    return {
        "w_ih": u(ks[0], (4 * hidden_size, in_features)),   # LSTM weight_ih_l0
        "w_hh": u(ks[1], (4 * hidden_size, hidden_size)),   # LSTM weight_hh_l0
        "b_ih": u(ks[2], (4 * hidden_size,)),
        "b_hh": u(ks[3], (4 * hidden_size,)),
        "w_lin": u(ks[4], (in_features, hidden_size)),       # Linear(H, In).weight
        "b_lin": u(ks[5], (in_features,)),
    }


def prepare_forecast_net_params(params):
    """One-time prep: transpose weights, fuse biases, pre-scale the i/f/o
    (sigmoid) gate rows by 0.5 so the kernel can use sigmoid(z)=0.5*tanh(z/2)+0.5
    with a single tanh over the whole gate row."""
    H = params["w_hh"].shape[1]
    scale = np.full((4 * H, 1), 0.5, np.float32)
    scale[2 * H:3 * H] = 1.0                      # g (cell candidate) gate keeps tanh(z)
    scale = jnp.asarray(scale)
    return {
        "wih_t": (params["w_ih"].astype(jnp.float32) * scale).T,        # (In, 4H)
        "whh_t": (params["w_hh"].astype(jnp.float32) * scale).T,        # (H, 4H)
        "bias": ((params["b_ih"] + params["b_hh"]).astype(jnp.float32)
                 * scale[:, 0]).reshape(1, 4 * H),                      # (1, 4H)
        "wlin_t": params["w_lin"].astype(jnp.float32).T,                # (H, In)
        "blin": params["b_lin"].astype(jnp.float32).reshape(1, -1),     # (1, In)
    }


# ---------------------------------------------------------------------------
# Pure-JAX reference (for correctness check)
# ---------------------------------------------------------------------------
def forecast_net_reference(params, x):
    B, T, In = x.shape
    H = params["w_hh"].shape[1]
    wih_t = params["w_ih"].T
    whh_t = params["w_hh"].T
    bias = params["b_ih"] + params["b_hh"]

    def cell(carry, x_t):
        h, c = carry
        gates = x_t @ wih_t + h @ whh_t + bias
        i = jax.nn.sigmoid(gates[:, 0 * H:1 * H])
        f = jax.nn.sigmoid(gates[:, 1 * H:2 * H])
        g = jnp.tanh(gates[:, 2 * H:3 * H])
        o = jax.nn.sigmoid(gates[:, 3 * H:4 * H])
        c = f * c + i * g
        h = o * jnp.tanh(c)
        return (h, c), h

    h0 = jnp.zeros((B, H), jnp.float32)
    c0 = jnp.zeros((B, H), jnp.float32)
    _, hs = jax.lax.scan(cell, (h0, c0), jnp.transpose(x, (1, 0, 2)))
    hs = jnp.transpose(hs, (1, 0, 2))                                # (B, T, H)
    return hs @ params["w_lin"].T + params["b_lin"]


if __name__ == "__main__":
    batch, seq_len = 2, 16
    in_features, hidden_size = 8, 32        # 4H = 128 -> lane-dense gate axis

    key = jax.random.PRNGKey(0)
    key, kx, kp = jax.random.split(key, 3)
    x = jax.random.normal(kx, (batch, seq_len, in_features), dtype=jnp.float32)
    params = init_forecast_net_params(kp, in_features, hidden_size)
    prepared = prepare_forecast_net_params(params)   # one-time weight prep

    out = forecast_net_forward(prepared, x)
    out = jax.block_until_ready(out)

    assert out.shape == (batch, seq_len, in_features), out.shape
    assert out.dtype == jnp.float32, out.dtype

    ref = jax.block_until_ready(forecast_net_reference(params, x))
    np.testing.assert_allclose(np.asarray(out), np.asarray(ref),
                               rtol=1e-4, atol=1e-4)

    print("KERNEL_OK")
</pallas_src>

<mosaic_0001>
module attributes {stable_mosaic.version = 11 : i64} {
  func.func @lstm_linear_kernel(%arg0: i32, %arg1: memref<32x8xf32, #tpu.memory_space<vmem>>, %arg2: memref<8x128xf32, #tpu.memory_space<vmem>>, %arg3: memref<32x128xf32, #tpu.memory_space<vmem>>, %arg4: memref<1x128xf32, #tpu.memory_space<vmem>>, %arg5: memref<32x8xf32, #tpu.memory_space<vmem>>, %arg6: memref<1x8xf32, #tpu.memory_space<vmem>>, %arg7: memref<32x8xf32, #tpu.memory_space<vmem>>) attributes {dimension_semantics = [#tpu.dimension_semantics<parallel>], iteration_bounds = array<i64: 1>, scalar_prefetch = 0 : i64, scratch_operands = 0 : i64, tpu.core_type = #tpu.core_type<tc>, window_params = [{transform_indices = @transform_0, window_bounds = array<i64: 32, 8>}, {pipeline_mode = #tpu.pipeline_mode<synchronous>, transform_indices = @transform_1, window_bounds = array<i64: 8, 128>}, {pipeline_mode = #tpu.pipeline_mode<synchronous>, transform_indices = @transform_2, window_bounds = array<i64: 32, 128>}, {pipeline_mode = #tpu.pipeline_mode<synchronous>, transform_indices = @transform_3, window_bounds = array<i64: 1, 128>}, {pipeline_mode = #tpu.pipeline_mode<synchronous>, transform_indices = @transform_4, window_bounds = array<i64: 32, 8>}, {pipeline_mode = #tpu.pipeline_mode<synchronous>, transform_indices = @transform_5, window_bounds = array<i64: 1, 8>}, {transform_indices = @transform_6, window_bounds = array<i64: 32, 8>}]} {
    %c0 = arith.constant 0 : index
    %c0_0 = arith.constant 0 : index
    %0 = vector.load %arg1[%c0, %c0_0] : memref<32x8xf32, #tpu.memory_space<vmem>>, vector<32x8xf32>
    %c0_1 = arith.constant 0 : index
    %c0_2 = arith.constant 0 : index
    %1 = vector.load %arg2[%c0_1, %c0_2] : memref<8x128xf32, #tpu.memory_space<vmem>>, vector<8x128xf32>
    %cst = arith.constant dense<0.000000e+00> : vector<32x128xf32>
    %2 = tpu.matmul %0, %1, %cst {dimension_numbers = #tpu.dot_dimension_numbers<[1], [0], [0], [1], [0, 0, 1, 1], [], []>} : vector<32x8xf32>, vector<8x128xf32>, vector<32x128xf32> -> vector<32x128xf32>
    %c0_3 = arith.constant 0 : index
    %c0_4 = arith.constant 0 : index
    %3 = vector.load %arg4[%c0_3, %c0_4] : memref<1x128xf32, #tpu.memory_space<vmem>>, vector<1x128xf32>
    %4 = vector.broadcast %3 : vector<1x128xf32> to vector<32x128xf32>
    %5 = arith.addf %2, %4 : vector<32x128xf32>
    %6 = vector.shape_cast %5 : vector<32x128xf32> to vector<2x16x128xf32>
    %c0_5 = arith.constant 0 : index
    %c0_6 = arith.constant 0 : index
    %7 = vector.load %arg3[%c0_5, %c0_6] : memref<32x128xf32, #tpu.memory_space<vmem>>, vector<32x128xf32>
    %8 = tpu.iota {dimensions = array<i32: 1>} : vector<1x128xi32>
    %c64_i32 = arith.constant 64 : i32
    %9 = vector.broadcast %c64_i32 : i32 to vector<1x128xi32>
    %10 = arith.cmpi sge, %8, %9 : vector<1x128xi32>
    %c96_i32 = arith.constant 96 : i32
    %11 = vector.broadcast %c96_i32 : i32 to vector<1x128xi32>
    %12 = arith.cmpi slt, %8, %11 : vector<1x128xi32>
    %13 = arith.andi %10, %12 : vector<1x128xi1>
    %cst_7 = arith.constant 1.000000e+00 : f32
    %cst_8 = arith.constant 5.000000e-01 : f32
    %14 = vector.broadcast %cst_7 : f32 to vector<1x128xf32>
    %15 = vector.broadcast %cst_8 : f32 to vector<1x128xf32>
    %16 = arith.select %13, %14, %15 : vector<1x128xi1>, vector<1x128xf32>
    %cst_9 = arith.constant 0.000000e+00 : f32
    %cst_10 = arith.constant 5.000000e-01 : f32
    %17 = vector.broadcast %cst_9 : f32 to vector<1x128xf32>
    %18 = vector.broadcast %cst_10 : f32 to vector<1x128xf32>
    %19 = arith.select %13, %17, %18 : vector<1x128xi1>, vector<1x128xf32>
    %cst_11 = arith.constant 0.000000e+00 : f32
    %20 = vector.broadcast %cst_11 : f32 to vector<2x32xf32>
    %cst_12 = arith.constant 0.000000e+00 : f32
    %21 = vector.broadcast %cst_12 : f32 to vector<2x32xf32>
    %22 = vector.extract_strided_slice %6 {offsets = [0, 0, 0], sizes = [2, 1, 128], strides = [1, 1, 1]} : vector<2x16x128xf32> to vector<2x1x128xf32>
    %23 = vector.shape_cast %22 : vector<2x1x128xf32> to vector<2x128xf32>
    %cst_13 = arith.constant dense<0.000000e+00> : vector<2x128xf32>
    %24 = tpu.matmul %20, %7, %cst_13 {dimension_numbers = #tpu.dot_dimension_numbers<[1], [0], [0], [1], [0, 0, 1, 1], [], []>} : vector<2x32xf32>, vector<32x128xf32>, vector<2x128xf32> -> vector<2x128xf32>
    %25 = arith.addf %23, %24 : vector<2x128xf32>
    %26 = math.tanh %25 : vector<2x128xf32>
    %27 = vector.broadcast %16 : vector<1x128xf32> to vector<2x128xf32>
    %28 = arith.mulf %26, %27 : vector<2x128xf32>
    %29 = vector.broadcast %19 : vector<1x128xf32> to vector<2x128xf32>
    %30 = arith.addf %28, %29 : vector<2x128xf32>
    %31 = vector.extract_strided_slice %30 {offsets = [0, 0], sizes = [2, 32], strides = [1, 1]} : vector<2x128xf32> to vector<2x32xf32>
    %32 = vector.extract_strided_slice %30 {offsets = [0, 32], sizes = [2, 32], strides = [1, 1]} : vector<2x128xf32> to vector<2x32xf32>
    %33 = vector.extract_strided_slice %30 {offsets = [0, 64], sizes = [2, 32], strides = [1, 1]} : vector<2x128xf32> to vector<2x32xf32>
    %34 = vector.extract_strided_slice %30 {offsets = [0, 96], sizes = [2, 32], strides = [1, 1]} : vector<2x128xf32> to vector<2x32xf32>
    %35 = arith.mulf %32, %21 : vector<2x32xf32>
    %36 = arith.mulf %31, %33 : vector<2x32xf32>
    %37 = arith.addf %35, %36 : vector<2x32xf32>
    %38 = math.tanh %37 : vector<2x32xf32>
    %39 = arith.mulf %34, %38 : vector<2x32xf32>
    %40 = vector.extract_strided_slice %6 {offsets = [0, 1, 0], sizes = [2, 1, 128], strides = [1, 1, 1]} : vector<2x16x128xf32> to vector<2x1x128xf32>
    %41 = vector.shape_cast %40 : vector<2x1x128xf32> to vector<2x128xf32>
    %cst_14 = arith.constant dense<0.000000e+00> : vector<2x128xf32>
    %42 = tpu.matmul %39, %7, %cst_14 {dimension_numbers = #tpu.dot_dimension_numbers<[1], [0], [0], [1], [0, 0, 1, 1], [], []>} : vector<2x32xf32>, vector<32x128xf32>, vector<2x128xf32> -> vector<2x128xf32>
    %43 = arith.addf %41, %42 : vector<2x128xf32>
    %44 = math.tanh %43 : vector<2x128xf32>
    %45 = vector.broadcast %16 : vector<1x128xf32> to vector<2x128xf32>
    %46 = arith.mulf %44, %45 : vector<2x128xf32>
    %47 = vector.broadcast %19 : vector<1x128xf32> to vector<2x128xf32>
    %48 = arith.addf %46, %47 : vector<2x128xf32>
    %49 = vector.extract_strided_slice %48 {offsets = [0, 0], sizes = [2, 32], strides = [1, 1]} : vector<2x128xf32> to vector<2x32xf32>
    %50 = vector.extract_strided_slice %48 {offsets = [0, 32], sizes = [2, 32], strides = [1, 1]} : vector<2x128xf32> to vector<2x32xf32>
    %51 = vector.extract_strided_slice %48 {offsets = [0, 64], sizes = [2, 32], strides = [1, 1]} : vector<2x128xf32> to vector<2x32xf32>
    %52 = vector.extract_strided_slice %48 {offsets = [0, 96], sizes = [2, 32], strides = [1, 1]} : vector<2x128xf32> to vector<2x32xf32>
    %53 = arith.mulf %50, %37 : vector<2x32xf32>
    %54 = arith.mulf %49, %51 : vector<2x32xf32>
    %55 = arith.addf %53, %54 : vector<2x32xf32>
    %56 = math.tanh %55 : vector<2x32xf32>
    %57 = arith.mulf %52, %56 : vector<2x32xf32>
    %58 = vector.extract_strided_slice %6 {offsets = [0, 2, 0], sizes = [2, 1, 128], strides = [1, 1, 1]} : vector<2x16x128xf32> to vector<2x1x128xf32>
    %59 = vector.shape_cast %58 : vector<2x1x128xf32> to vector<2x128xf32>
    %cst_15 = arith.constant dense<0.000000e+00> : vector<2x128xf32>
    %60 = tpu.matmul %57, %7, %cst_15 {dimension_numbers = #tpu.dot_dimension_numbers<[1], [0], [0], [1], [0, 0, 1, 1], [], []>} : vector<2x32xf32>, vector<32x128xf32>, vector<2x128xf32> -> vector<2x128xf32>
    %61 = arith.addf %59, %60 : vector<2x128xf32>
    %62 = math.tanh %61 : vector<2x128xf32>
    %63 = vector.broadcast %16 : vector<1x128xf32> to vector<2x128xf32>
    %64 = arith.mulf %62, %63 : vector<2x128xf32>
    %65 = vector.broadcast %19 : vector<1x128xf32> to vector<2x128xf32>
    %66 = arith.addf %64, %65 : vector<2x128xf32>
    %67 = vector.extract_strided_slice %66 {offsets = [0, 0], sizes = [2, 32], strides = [1, 1]} : vector<2x128xf32> to vector<2x32xf32>
    %68 = vector.extract_strided_slice %66 {offsets = [0, 32], sizes = [2, 32], strides = [1, 1]} : vector<2x128xf32> to vector<2x32xf32>
    %69 = vector.extract_strided_slice %66 {offsets = [0, 64], sizes = [2, 32], strides = [1, 1]} : vector<2x128xf32> to vector<2x32xf32>
    %70 = vector.extract_strided_slice %66 {offsets = [0, 96], sizes = [2, 32], strides = [1, 1]} : vector<2x128xf32> to vector<2x32xf32>
    %71 = arith.mulf %68, %55 : vector<2x32xf32>
    %72 = arith.mulf %67, %69 : vector<2x32xf32>
    %73 = arith.addf %71, %72 : vector<2x32xf32>
    %74 = math.tanh %73 : vector<2x32xf32>
    %75 = arith.mulf %70, %74 : vector<2x32xf32>
    %76 = vector.extract_strided_slice %6 {offsets = [0, 3, 0], sizes = [2, 1, 128], strides = [1, 1, 1]} : vector<2x16x128xf32> to vector<2x1x128xf32>
    %77 = vector.shape_cast %76 : vector<2x1x128xf32> to vector<2x128xf32>
    %cst_16 = arith.constant dense<0.000000e+00> : vector<2x128xf32>
    %78 = tpu.matmul %75, %7, %cst_16 {dimension_numbers = #tpu.dot_dimension_numbers<[1], [0], [0], [1], [0, 0, 1, 1], [], []>} : vector<2x32xf32>, vector<32x128xf32>, vector<2x128xf32> -> vector<2x128xf32>
    %79 = arith.addf %77, %78 : vector<2x128xf32>
    %80 = math.tanh %79 : vector<2x128xf32>
    %81 = vector.broadcast %16 : vector<1x128xf32> to vector<2x128xf32>
    %82 = arith.mulf %80, %81 : vector<2x128xf32>
    %83 = vector.broadcast %19 : vector<1x128xf32> to vector<2x128xf32>
    %84 = arith.addf %82, %83 : vector<2x128xf32>
    %85 = vector.extract_strided_slice %84 {offsets = [0, 0], sizes = [2, 32], strides = [1, 1]} : vector<2x128xf32> to vector<2x32xf32>
    %86 = vector.extract_strided_slice %84 {offsets = [0, 32], sizes = [2, 32], strides = [1, 1]} : vector<2x128xf32> to vector<2x32xf32>
    %87 = vector.extract_strided_slice %84 {offsets = [0, 64], sizes = [2, 32], strides = [1, 1]} : vector<2x128xf32> to vector<2x32xf32>
    %88 = vector.extract_strided_slice %84 {offsets = [0, 96], sizes = [2, 32], strides = [1, 1]} : vector<2x128xf32> to vector<2x32xf32>
    %89 = arith.mulf %86, %73 : vector<2x32xf32>
    %90 = arith.mulf %85, %87 : vector<2x32xf32>
    %91 = arith.addf %89, %90 : vector<2x32xf32>
    %92 = math.tanh %91 : vector<2x32xf32>
    %93 = arith.mulf %88, %92 : vector<2x32xf32>
    %94 = vector.extract_strided_slice %6 {offsets = [0, 4, 0], sizes = [2, 1, 128], strides = [1, 1, 1]} : vector<2x16x128xf32> to vector<2x1x128xf32>
    %95 = vector.shape_cast %94 : vector<2x1x128xf32> to vector<2x128xf32>
    %cst_17 = arith.constant dense<0.000000e+00> : vector<2x128xf32>
    %96 = tpu.matmul %93, %7, %cst_17 {dimension_numbers = #tpu.dot_dimension_numbers<[1], [0], [0], [1], [0, 0, 1, 1], [], []>} : vector<2x32xf32>, vector<32x128xf32>, vector<2x128xf32> -> vector<2x128xf32>
    %97 = arith.addf %95, %96 : vector<2x128xf32>
    %98 = math.tanh %97 : vector<2x128xf32>
    %99 = vector.broadcast %16 : vector<1x128xf32> to vector<2x128xf32>
    %100 = arith.mulf %98, %99 : vector<2x128xf32>
    %101 = vector.broadcast %19 : vector<1x128xf32> to vector<2x128xf32>
    %102 = arith.addf %100, %101 : vector<2x128xf32>
    %103 = vector.extract_strided_slice %102 {offsets = [0, 0], sizes = [2, 32], strides = [1, 1]} : vector<2x128xf32> to vector<2x32xf32>
    %104 = vector.extract_strided_slice %102 {offsets = [0, 32], sizes = [2, 32], strides = [1, 1]} : vector<2x128xf32> to vector<2x32xf32>
    %105 = vector.extract_strided_slice %102 {offsets = [0, 64], sizes = [2, 32], strides = [1, 1]} : vector<2x128xf32> to vector<2x32xf32>
    %106 = vector.extract_strided_slice %102 {offsets = [0, 96], sizes = [2, 32], strides = [1, 1]} : vector<2x128xf32> to vector<2x32xf32>
    %107 = arith.mulf %104, %91 : vector<2x32xf32>
    %108 = arith.mulf %103, %105 : vector<2x32xf32>
    %109 = arith.addf %107, %108 : vector<2x32xf32>
    %110 = math.tanh %109 : vector<2x32xf32>
    %111 = arith.mulf %106, %110 : vector<2x32xf32>
    %112 = vector.extract_strided_slice %6 {offsets = [0, 5, 0], sizes = [2, 1, 128], strides = [1, 1, 1]} : vector<2x16x128xf32> to vector<2x1x128xf32>
    %113 = vector.shape_cast %112 : vector<2x1x128xf32> to vector<2x128xf32>
    %cst_18 = arith.constant dense<0.000000e+00> : vector<2x128xf32>
    %114 = tpu.matmul %111, %7, %cst_18 {dimension_numbers = #tpu.dot_dimension_numbers<[1], [0], [0], [1], [0, 0, 1, 1], [], []>} : vector<2x32xf32>, vector<32x128xf32>, vector<2x128xf32> -> vector<2x128xf32>
    %115 = arith.addf %113, %114 : vector<2x128xf32>
    %116 = math.tanh %115 : vector<2x128xf32>
    %117 = vector.broadcast %16 : vector<1x128xf32> to vector<2x128xf32>
    %118 = arith.mulf %116, %117 : vector<2x128xf32>
    %119 = vector.broadcast %19 : vector<1x128xf32> to vector<2x128xf32>
    %120 = arith.addf %118, %119 : vector<2x128xf32>
    %121 = vector.extract_strided_slice %120 {offsets = [0, 0], sizes = [2, 32], strides = [1, 1]} : vector<2x128xf32> to vector<2x32xf32>
    %122 = vector.extract_strided_slice %120 {offsets = [0, 32], sizes = [2, 32], strides = [1, 1]} : vector<2x128xf32> to vector<2x32xf32>
    %123 = vector.extract_strided_slice %120 {offsets = [0, 64], sizes = [2, 32], strides = [1, 1]} : vector<2x128xf32> to vector<2x32xf32>
    %124 = vector.extract_strided_slice %120 {offsets = [0, 96], sizes = [2, 32], strides = [1, 1]} : vector<2x128xf32> to vector<2x32xf32>
    %125 = arith.mulf %122, %109 : vector<2x32xf32>
    %126 = arith.mulf %121, %123 : vector<2x32xf32>
    %127 = arith.addf %125, %126 : vector<2x32xf32>
    %128 = math.tanh %127 : vector<2x32xf32>
    %129 = arith.mulf %124, %128 : vector<2x32xf32>
    %130 = vector.extract_strided_slice %6 {offsets = [0, 6, 0], sizes = [2, 1, 128], strides = [1, 1, 1]} : vector<2x16x128xf32> to vector<2x1x128xf32>
    %131 = vector.shape_cast %130 : vector<2x1x128xf32> to vector<2x128xf32>
    %cst_19 = arith.constant dense<0.000000e+00> : vector<2x128xf32>
    %132 = tpu.matmul %129, %7, %cst_19 {dimension_numbers = #tpu.dot_dimension_numbers<[1], [0], [0], [1], [0, 0, 1, 1], [], []>} : vector<2x32xf32>, vector<32x128xf32>, vector<2x128xf32> -> vector<2x128xf32>
    %133 = arith.addf %131, %132 : vector<2x128xf32>
    %134 = math.tanh %133 : vector<2x128xf32>
    %135 = vector.broadcast %16 : vector<1x128xf32> to vector<2x128xf32>
    %136 = arith.mulf %134, %135 : vector<2x128xf32>
    %137 = vector.broadcast %19 : vector<1x128xf32> to vector<2x128xf32>
    %138 = arith.addf %136, %137 : vector<2x128xf32>
    %139 = vector.extract_strided_slice %138 {offsets = [0, 0], sizes = [2, 32], strides = [1, 1]} : vector<2x128xf32> to vector<2x32xf32>
    %140 = vector.extract_strided_slice %138 {offsets = [0, 32], sizes = [2, 32], strides = [1, 1]} : vector<2x128xf32> to vector<2x32xf32>
    %141 = vector.extract_strided_slice %138 {offsets = [0, 64], sizes = [2, 32], strides = [1, 1]} : vector<2x128xf32> to vector<2x32xf32>
    %142 = vector.extract_strided_slice %138 {offsets = [0, 96], sizes = [2, 32], strides = [1, 1]} : vector<2x128xf32> to vector<2x32xf32>
    %143 = arith.mulf %140, %127 : vector<2x32xf32>
    %144 = arith.mulf %139, %141 : vector<2x32xf32>
    %145 = arith.addf %143, %144 : vector<2x32xf32>
    %146 = math.tanh %145 : vector<2x32xf32>
    %147 = arith.mulf %142, %146 : vector<2x32xf32>
    %148 = vector.extract_strided_slice %6 {offsets = [0, 7, 0], sizes = [2, 1, 128], strides = [1, 1, 1]} : vector<2x16x128xf32> to vector<2x1x128xf32>
    %149 = vector.shape_cast %148 : vector<2x1x128xf32> to vector<2x128xf32>
    %cst_20 = arith.constant dense<0.000000e+00> : vector<2x128xf32>
    %150 = tpu.matmul %147, %7, %cst_20 {dimension_numbers = #tpu.dot_dimension_numbers<[1], [0], [0], [1], [0, 0, 1, 1], [], []>} : vector<2x32xf32>, vector<32x128xf32>, vector<2x128xf32> -> vector<2x128xf32>
    %151 = arith.addf %149, %150 : vector<2x128xf32>
    %152 = math.tanh %151 : vector<2x128xf32>
    %153 = vector.broadcast %16 : vector<1x128xf32> to vector<2x128xf32>
    %154 = arith.mulf %152, %153 : vector<2x128xf32>
    %155 = vector.broadcast %19 : vector<1x128xf32> to vector<2x128xf32>
    %156 = arith.addf %154, %155 : vector<2x128xf32>
    %157 = vector.extract_strided_slice %156 {offsets = [0, 0], sizes = [2, 32], strides = [1, 1]} : vector<2x128xf32> to vector<2x32xf32>
    %158 = vector.extract_strided_slice %156 {offsets = [0, 32], sizes = [2, 32], strides = [1, 1]} : vector<2x128xf32> to vector<2x32xf32>
    %159 = vector.extract_strided_slice %156 {offsets = [0, 64], sizes = [2, 32], strides = [1, 1]} : vector<2x128xf32> to vector<2x32xf32>
    %160 = vector.extract_strided_slice %156 {offsets = [0, 96], sizes = [2, 32], strides = [1, 1]} : vector<2x128xf32> to vector<2x32xf32>
    %161 = arith.mulf %158, %145 : vector<2x32xf32>
    %162 = arith.mulf %157, %159 : vector<2x32xf32>
    %163 = arith.addf %161, %162 : vector<2x32xf32>
    %164 = math.tanh %163 : vector<2x32xf32>
    %165 = arith.mulf %160, %164 : vector<2x32xf32>
    %166 = vector.extract_strided_slice %6 {offsets = [0, 8, 0], sizes = [2, 1, 128], strides = [1, 1, 1]} : vector<2x16x128xf32> to vector<2x1x128xf32>
    %167 = vector.shape_cast %166 : vector<2x1x128xf32> to vector<2x128xf32>
    %cst_21 = arith.constant dense<0.000000e+00> : vector<2x128xf32>
    %168 = tpu.matmul %165, %7, %cst_21 {dimension_numbers = #tpu.dot_dimension_numbers<[1], [0], [0], [1], [0, 0, 1, 1], [], []>} : vector<2x32xf32>, vector<32x128xf32>, vector<2x128xf32> -> vector<2x128xf32>
    %169 = arith.addf %167, %168 : vector<2x128xf32>
    %170 = math.tanh %169 : vector<2x128xf32>
    %171 = vector.broadcast %16 : vector<1x128xf32> to vector<2x128xf32>
    %172 = arith.mulf %170, %171 : vector<2x128xf32>
    %173 = vector.broadcast %19 : vector<1x128xf32> to vector<2x128xf32>
    %174 = arith.addf %172, %173 : vector<2x128xf32>
    %175 = vector.extract_strided_slice %174 {offsets = [0, 0], sizes = [2, 32], strides = [1, 1]} : vector<2x128xf32> to vector<2x32xf32>
    %176 = vector.extract_strided_slice %174 {offsets = [0, 32], sizes = [2, 32], strides = [1, 1]} : vector<2x128xf32> to vector<2x32xf32>
    %177 = vector.extract_strided_slice %174 {offsets = [0, 64], sizes = [2, 32], strides = [1, 1]} : vector<2x128xf32> to vector<2x32xf32>
    %178 = vector.extract_strided_slice %174 {offsets = [0, 96], sizes = [2, 32], strides = [1, 1]} : vector<2x128xf32> to vector<2x32xf32>
    %179 = arith.mulf %176, %163 : vector<2x32xf32>
    %180 = arith.mulf %175, %177 : vector<2x32xf32>
    %181 = arith.addf %179, %180 : vector<2x32xf32>
    %182 = math.tanh %181 : vector<2x32xf32>
    %183 = arith.mulf %178, %182 : vector<2x32xf32>
    %184 = vector.extract_strided_slice %6 {offsets = [0, 9, 0], sizes = [2, 1, 128], strides = [1, 1, 1]} : vector<2x16x128xf32> to vector<2x1x128xf32>
    %185 = vector.shape_cast %184 : vector<2x1x128xf32> to vector<2x128xf32>
    %cst_22 = arith.constant dense<0.000000e+00> : vector<2x128xf32>
    %186 = tpu.matmul %183, %7, %cst_22 {dimension_numbers = #tpu.dot_dimension_numbers<[1], [0], [0], [1], [0, 0, 1, 1], [], []>} : vector<2x32xf32>, vector<32x128xf32>, vector<2x128xf32> -> vector<2x128xf32>
    %187 = arith.addf %185, %186 : vector<2x128xf32>
    %188 = math.tanh %187 : vector<2x128xf32>
    %189 = vector.broadcast %16 : vector<1x128xf32> to vector<2x128xf32>
    %190 = arith.mulf %188, %189 : vector<2x128xf32>
    %191 = vector.broadcast %19 : vector<1x128xf32> to vector<2x128xf32>
    %192 = arith.addf %190, %191 : vector<2x128xf32>
    %193 = vector.extract_strided_slice %192 {offsets = [0, 0], sizes = [2, 32], strides = [1, 1]} : vector<2x128xf32> to vector<2x32xf32>
    %194 = vector.extract_strided_slice %192 {offsets = [0, 32], sizes = [2, 32], strides = [1, 1]} : vector<2x128xf32> to vector<2x32xf32>
    %195 = vector.extract_strided_slice %192 {offsets = [0, 64], sizes = [2, 32], strides = [1, 1]} : vector<2x128xf32> to vector<2x32xf32>
    %196 = vector.extract_strided_slice %192 {offsets = [0, 96], sizes = [2, 32], strides = [1, 1]} : vector<2x128xf32> to vector<2x32xf32>
    %197 = arith.mulf %194, %181 : vector<2x32xf32>
    %198 = arith.mulf %193, %195 : vector<2x32xf32>
    %199 = arith.addf %197, %198 : vector<2x32xf32>
    %200 = math.tanh %199 : vector<2x32xf32>
    %201 = arith.mulf %196, %200 : vector<2x32xf32>
    %202 = vector.extract_strided_slice %6 {offsets = [0, 10, 0], sizes = [2, 1, 128], strides = [1, 1, 1]} : vector<2x16x128xf32> to vector<2x1x128xf32>
    %203 = vector.shape_cast %202 : vector<2x1x128xf32> to vector<2x128xf32>
    %cst_23 = arith.constant dense<0.000000e+00> : vector<2x128xf32>
    %204 = tpu.matmul %201, %7, %cst_23 {dimension_numbers = #tpu.dot_dimension_numbers<[1], [0], [0], [1], [0, 0, 1, 1], [], []>} : vector<2x32xf32>, vector<32x128xf32>, vector<2x128xf32> -> vector<2x128xf32>
    %205 = arith.addf %203, %204 : vector<2x128xf32>
    %206 = math.tanh %205 : vector<2x128xf32>
    %207 = vector.broadcast %16 : vector<1x128xf32> to vector<2x128xf32>
    %208 = arith.mulf %206, %207 : vector<2x128xf32>
    %209 = vector.broadcast %19 : vector<1x128xf32> to vector<2x128xf32>
    %210 = arith.addf %208, %209 : vector<2x128xf32>
    %211 = vector.extract_strided_slice %210 {offsets = [0, 0], sizes = [2, 32], strides = [1, 1]} : vector<2x128xf32> to vector<2x32xf32>
    %212 = vector.extract_strided_slice %210 {offsets = [0, 32], sizes = [2, 32], strides = [1, 1]} : vector<2x128xf32> to vector<2x32xf32>
    %213 = vector.extract_strided_slice %210 {offsets = [0, 64], sizes = [2, 32], strides = [1, 1]} : vector<2x128xf32> to vector<2x32xf32>
    %214 = vector.extract_strided_slice %210 {offsets = [0, 96], sizes = [2, 32], strides = [1, 1]} : vector<2x128xf32> to vector<2x32xf32>
    %215 = arith.mulf %212, %199 : vector<2x32xf32>
    %216 = arith.mulf %211, %213 : vector<2x32xf32>
    %217 = arith.addf %215, %216 : vector<2x32xf32>
    %218 = math.tanh %217 : vector<2x32xf32>
    %219 = arith.mulf %214, %218 : vector<2x32xf32>
    %220 = vector.extract_strided_slice %6 {offsets = [0, 11, 0], sizes = [2, 1, 128], strides = [1, 1, 1]} : vector<2x16x128xf32> to vector<2x1x128xf32>
    %221 = vector.shape_cast %220 : vector<2x1x128xf32> to vector<2x128xf32>
    %cst_24 = arith.constant dense<0.000000e+00> : vector<2x128xf32>
    %222 = tpu.matmul %219, %7, %cst_24 {dimension_numbers = #tpu.dot_dimension_numbers<[1], [0], [0], [1], [0, 0, 1, 1], [], []>} : vector<2x32xf32>, vector<32x128xf32>, vector<2x128xf32> -> vector<2x128xf32>
    %223 = arith.addf %221, %222 : vector<2x128xf32>
    %224 = math.tanh %223 : vector<2x128xf32>
    %225 = vector.broadcast %16 : vector<1x128xf32> to vector<2x128xf32>
    %226 = arith.mulf %224, %225 : vector<2x128xf32>
    %227 = vector.broadcast %19 : vector<1x128xf32> to vector<2x128xf32>
    %228 = arith.addf %226, %227 : vector<2x128xf32>
    %229 = vector.extract_strided_slice %228 {offsets = [0, 0], sizes = [2, 32], strides = [1, 1]} : vector<2x128xf32> to vector<2x32xf32>
    %230 = vector.extract_strided_slice %228 {offsets = [0, 32], sizes = [2, 32], strides = [1, 1]} : vector<2x128xf32> to vector<2x32xf32>
    %231 = vector.extract_strided_slice %228 {offsets = [0, 64], sizes = [2, 32], strides = [1, 1]} : vector<2x128xf32> to vector<2x32xf32>
    %232 = vector.extract_strided_slice %228 {offsets = [0, 96], sizes = [2, 32], strides = [1, 1]} : vector<2x128xf32> to vector<2x32xf32>
    %233 = arith.mulf %230, %217 : vector<2x32xf32>
    %234 = arith.mulf %229, %231 : vector<2x32xf32>
    %235 = arith.addf %233, %234 : vector<2x32xf32>
    %236 = math.tanh %235 : vector<2x32xf32>
    %237 = arith.mulf %232, %236 : vector<2x32xf32>
    %238 = vector.extract_strided_slice %6 {offsets = [0, 12, 0], sizes = [2, 1, 128], strides = [1, 1, 1]} : vector<2x16x128xf32> to vector<2x1x128xf32>
    %239 = vector.shape_cast %238 : vector<2x1x128xf32> to vector<2x128xf32>
    %cst_25 = arith.constant dense<0.000000e+00> : vector<2x128xf32>
    %240 = tpu.matmul %237, %7, %cst_25 {dimension_numbers = #tpu.dot_dimension_numbers<[1], [0], [0], [1], [0, 0, 1, 1], [], []>} : vector<2x32xf32>, vector<32x128xf32>, vector<2x128xf32> -> vector<2x128xf32>
    %241 = arith.addf %239, %240 : vector<2x128xf32>
    %242 = math.tanh %241 : vector<2x128xf32>
    %243 = vector.broadcast %16 : vector<1x128xf32> to vector<2x128xf32>
    %244 = arith.mulf %242, %243 : vector<2x128xf32>
    %245 = vector.broadcast %19 : vector<1x128xf32> to vector<2x128xf32>
    %246 = arith.addf %244, %245 : vector<2x128xf32>
    %247 = vector.extract_strided_slice %246 {offsets = [0, 0], sizes = [2, 32], strides = [1, 1]} : vector<2x128xf32> to vector<2x32xf32>
    %248 = vector.extract_strided_slice %246 {offsets = [0, 32], sizes = [2, 32], strides = [1, 1]} : vector<2x128xf32> to vector<2x32xf32>
    %249 = vector.extract_strided_slice %246 {offsets = [0, 64], sizes = [2, 32], strides = [1, 1]} : vector<2x128xf32> to vector<2x32xf32>
    %250 = vector.extract_strided_slice %246 {offsets = [0, 96], sizes = [2, 32], strides = [1, 1]} : vector<2x128xf32> to vector<2x32xf32>
    %251 = arith.mulf %248, %235 : vector<2x32xf32>
    %252 = arith.mulf %247, %249 : vector<2x32xf32>
    %253 = arith.addf %251, %252 : vector<2x32xf32>
    %254 = math.tanh %253 : vector<2x32xf32>
    %255 = arith.mulf %250, %254 : vector<2x32xf32>
    %256 = vector.extract_strided_slice %6 {offsets = [0, 13, 0], sizes = [2, 1, 128], strides = [1, 1, 1]} : vector<2x16x128xf32> to vector<2x1x128xf32>
    %257 = vector.shape_cast %256 : vector<2x1x128xf32> to vector<2x128xf32>
    %cst_26 = arith.constant dense<0.000000e+00> : vector<2x128xf32>
    %258 = tpu.matmul %255, %7, %cst_26 {dimension_numbers = #tpu.dot_dimension_numbers<[1], [0], [0], [1], [0, 0, 1, 1], [], []>} : vector<2x32xf32>, vector<32x128xf32>, vector<2x128xf32> -> vector<2x128xf32>
    %259 = arith.addf %257, %258 : vector<2x128xf32>
    %260 = math.tanh %259 : vector<2x128xf32>
    %261 = vector.broadcast %16 : vector<1x128xf32> to vector<2x128xf32>
    %262 = arith.mulf %260, %261 : vector<2x128xf32>
    %263 = vector.broadcast %19 : vector<1x128xf32> to vector<2x128xf32>
    %264 = arith.addf %262, %263 : vector<2x128xf32>
    %265 = vector.extract_strided_slice %264 {offsets = [0, 0], sizes = [2, 32], strides = [1, 1]} : vector<2x128xf32> to vector<2x32xf32>
    %266 = vector.extract_strided_slice %264 {offsets = [0, 32], sizes = [2, 32], strides = [1, 1]} : vector<2x128xf32> to vector<2x32xf32>
    %267 = vector.extract_strided_slice %264 {offsets = [0, 64], sizes = [2, 32], strides = [1, 1]} : vector<2x128xf32> to vector<2x32xf32>
    %268 = vector.extract_strided_slice %264 {offsets = [0, 96], sizes = [2, 32], strides = [1, 1]} : vector<2x128xf32> to vector<2x32xf32>
    %269 = arith.mulf %266, %253 : vector<2x32xf32>
    %270 = arith.mulf %265, %267 : vector<2x32xf32>
    %271 = arith.addf %269, %270 : vector<2x32xf32>
    %272 = math.tanh %271 : vector<2x32xf32>
    %273 = arith.mulf %268, %272 : vector<2x32xf32>
    %274 = vector.extract_strided_slice %6 {offsets = [0, 14, 0], sizes = [2, 1, 128], strides = [1, 1, 1]} : vector<2x16x128xf32> to vector<2x1x128xf32>
    %275 = vector.shape_cast %274 : vector<2x1x128xf32> to vector<2x128xf32>
    %cst_27 = arith.constant dense<0.000000e+00> : vector<2x128xf32>
    %276 = tpu.matmul %273, %7, %cst_27 {dimension_numbers = #tpu.dot_dimension_numbers<[1], [0], [0], [1], [0, 0, 1, 1], [], []>} : vector<2x32xf32>, vector<32x128xf32>, vector<2x128xf32> -> vector<2x128xf32>
    %277 = arith.addf %275, %276 : vector<2x128xf32>
    %278 = math.tanh %277 : vector<2x128xf32>
    %279 = vector.broadcast %16 : vector<1x128xf32> to vector<2x128xf32>
    %280 = arith.mulf %278, %279 : vector<2x128xf32>
    %281 = vector.broadcast %19 : vector<1x128xf32> to vector<2x128xf32>
    %282 = arith.addf %280, %281 : vector<2x128xf32>
    %283 = vector.extract_strided_slice %282 {offsets = [0, 0], sizes = [2, 32], strides = [1, 1]} : vector<2x128xf32> to vector<2x32xf32>
    %284 = vector.extract_strided_slice %282 {offsets = [0, 32], sizes = [2, 32], strides = [1, 1]} : vector<2x128xf32> to vector<2x32xf32>
    %285 = vector.extract_strided_slice %282 {offsets = [0, 64], sizes = [2, 32], strides = [1, 1]} : vector<2x128xf32> to vector<2x32xf32>
    %286 = vector.extract_strided_slice %282 {offsets = [0, 96], sizes = [2, 32], strides = [1, 1]} : vector<2x128xf32> to vector<2x32xf32>
    %287 = arith.mulf %284, %271 : vector<2x32xf32>
    %288 = arith.mulf %283, %285 : vector<2x32xf32>
    %289 = arith.addf %287, %288 : vector<2x32xf32>
    %290 = math.tanh %289 : vector<2x32xf32>
    %291 = arith.mulf %286, %290 : vector<2x32xf32>
    %292 = vector.extract_strided_slice %6 {offsets = [0, 15, 0], sizes = [2, 1, 128], strides = [1, 1, 1]} : vector<2x16x128xf32> to vector<2x1x128xf32>
    %293 = vector.shape_cast %292 : vector<2x1x128xf32> to vector<2x128xf32>
    %cst_28 = arith.constant dense<0.000000e+00> : vector<2x128xf32>
    %294 = tpu.matmul %291, %7, %cst_28 {dimension_numbers = #tpu.dot_dimension_numbers<[1], [0], [0], [1], [0, 0, 1, 1], [], []>} : vector<2x32xf32>, vector<32x128xf32>, vector<2x128xf32> -> vector<2x128xf32>
    %295 = arith.addf %293, %294 : vector<2x128xf32>
    %296 = math.tanh %295 : vector<2x128xf32>
    %297 = vector.broadcast %16 : vector<1x128xf32> to vector<2x128xf32>
    %298 = arith.mulf %296, %297 : vector<2x128xf32>
    %299 = vector.broadcast %19 : vector<1x128xf32> to vector<2x128xf32>
    %300 = arith.addf %298, %299 : vector<2x128xf32>
    %301 = vector.extract_strided_slice %300 {offsets = [0, 0], sizes = [2, 32], strides = [1, 1]} : vector<2x128xf32> to vector<2x32xf32>
    %302 = vector.extract_strided_slice %300 {offsets = [0, 32], sizes = [2, 32], strides = [1, 1]} : vector<2x128xf32> to vector<2x32xf32>
    %303 = vector.extract_strided_slice %300 {offsets = [0, 64], sizes = [2, 32], strides = [1, 1]} : vector<2x128xf32> to vector<2x32xf32>
    %304 = vector.extract_strided_slice %300 {offsets = [0, 96], sizes = [2, 32], strides = [1, 1]} : vector<2x128xf32> to vector<2x32xf32>
    %305 = arith.mulf %302, %289 : vector<2x32xf32>
    %306 = arith.mulf %301, %303 : vector<2x32xf32>
    %307 = arith.addf %305, %306 : vector<2x32xf32>
    %308 = math.tanh %307 : vector<2x32xf32>
    %309 = arith.mulf %304, %308 : vector<2x32xf32>
    %310 = vector.shape_cast %39 : vector<2x32xf32> to vector<2x1x32xf32>
    %311 = vector.shape_cast %57 : vector<2x32xf32> to vector<2x1x32xf32>
    %312 = vector.shape_cast %75 : vector<2x32xf32> to vector<2x1x32xf32>
    %313 = vector.shape_cast %93 : vector<2x32xf32> to vector<2x1x32xf32>
    %314 = vector.shape_cast %111 : vector<2x32xf32> to vector<2x1x32xf32>
    %315 = vector.shape_cast %129 : vector<2x32xf32> to vector<2x1x32xf32>
    %316 = vector.shape_cast %147 : vector<2x32xf32> to vector<2x1x32xf32>
    %317 = vector.shape_cast %165 : vector<2x32xf32> to vector<2x1x32xf32>
    %318 = vector.shape_cast %183 : vector<2x32xf32> to vector<2x1x32xf32>
    %319 = vector.shape_cast %201 : vector<2x32xf32> to vector<2x1x32xf32>
    %320 = vector.shape_cast %219 : vector<2x32xf32> to vector<2x1x32xf32>
    %321 = vector.shape_cast %237 : vector<2x32xf32> to vector<2x1x32xf32>
    %322 = vector.shape_cast %255 : vector<2x32xf32> to vector<2x1x32xf32>
    %323 = vector.shape_cast %273 : vector<2x32xf32> to vector<2x1x32xf32>
    %324 = vector.shape_cast %291 : vector<2x32xf32> to vector<2x1x32xf32>
    %325 = vector.shape_cast %309 : vector<2x32xf32> to vector<2x1x32xf32>
    %326 = tpu.concatenate %310, %311, %312, %313, %314, %315, %316, %317, %318, %319, %320, %321, %322, %323, %324, %325 in 1 : vector<2x1x32xf32>, vector<2x1x32xf32>, vector<2x1x32xf32>, vector<2x1x32xf32>, vector<2x1x32xf32>, vector<2x1x32xf32>, vector<2x1x32xf32>, vector<2x1x32xf32>, vector<2x1x32xf32>, vector<2x1x32xf32>, vector<2x1x32xf32>, vector<2x1x32xf32>, vector<2x1x32xf32>, vector<2x1x32xf32>, vector<2x1x32xf32>, vector<2x1x32xf32> -> vector<2x16x32xf32>
    %327 = vector.shape_cast %326 : vector<2x16x32xf32> to vector<32x32xf32>
    %c0_29 = arith.constant 0 : index
    %c0_30 = arith.constant 0 : index
    %328 = vector.load %arg5[%c0_29, %c0_30] : memref<32x8xf32, #tpu.memory_space<vmem>>, vector<32x8xf32>
    %cst_31 = arith.constant dense<0.000000e+00> : vector<32x8xf32>
    %329 = tpu.matmul %327, %328, %cst_31 {dimension_numbers = #tpu.dot_dimension_numbers<[1], [0], [0], [1], [0, 0, 1, 1], [], []>} : vector<32x32xf32>, vector<32x8xf32>, vector<32x8xf32> -> vector<32x8xf32>
    %c0_32 = arith.constant 0 : index
    %c0_33 = arith.constant 0 : index
    %330 = vector.load %arg6[%c0_32, %c0_33] : memref<1x8xf32, #tpu.memory_space<vmem>>, vector<1x8xf32>
    %331 = vector.broadcast %330 : vector<1x8xf32> to vector<32x8xf32>
    %332 = arith.addf %329, %331 : vector<32x8xf32>
    %c0_34 = arith.constant 0 : index
    %c0_35 = arith.constant 0 : index
    %333 = vector.load %arg7[%c0_34, %c0_35] : memref<32x8xf32, #tpu.memory_space<vmem>>, vector<32x8xf32>
    tpu.vector_store %arg7[%c0_34, %c0_35], %332 {strides = array<i32>} : memref<32x8xf32, #tpu.memory_space<vmem>>, vector<32x8xf32>,
    return
  }
  func.func @transform_0(%arg0: i32) -> (i32, i32) {
    %c0_i32 = arith.constant 0 : i32
    %c0_i32_0 = arith.constant 0 : i32
    return %arg0, %c0_i32 : i32, i32
  }
  func.func @transform_1(%arg0: i32) -> (i32, i32) {
    %c0_i32 = arith.constant 0 : i32
    %c0_i32_0 = arith.constant 0 : i32
    %c0_i32_1 = arith.constant 0 : i32
    return %c0_i32, %c0_i32_0 : i32, i32
  }
  func.func @transform_2(%arg0: i32) -> (i32, i32) {
    %c0_i32 = arith.constant 0 : i32
    %c0_i32_0 = arith.constant 0 : i32
    %c0_i32_1 = arith.constant 0 : i32
    return %c0_i32, %c0_i32_0 : i32, i32
  }
  func.func @transform_3(%arg0: i32) -> (i32, i32) {
    %c0_i32 = arith.constant 0 : i32
    %c0_i32_0 = arith.constant 0 : i32
    %c0_i32_1 = arith.constant 0 : i32
    return %c0_i32, %c0_i32_0 : i32, i32
  }
  func.func @transform_4(%arg0: i32) -> (i32, i32) {
    %c0_i32 = arith.constant 0 : i32
    %c0_i32_0 = arith.constant 0 : i32
    %c0_i32_1 = arith.constant 0 : i32
    return %c0_i32, %c0_i32_0 : i32, i32
  }
  func.func @transform_5(%arg0: i32) -> (i32, i32) {
    %c0_i32 = arith.constant 0 : i32
    %c0_i32_0 = arith.constant 0 : i32
    %c0_i32_1 = arith.constant 0 : i32
    return %c0_i32, %c0_i32_0 : i32, i32
  }
  func.func @transform_6(%arg0: i32) -> (i32, i32) {
    %c0_i32 = arith.constant 0 : i32
    %c0_i32_0 = arith.constant 0 : i32
    return %arg0, %c0_i32 : i32, i32
  }
}

</mosaic_0001>

<llo_original>
// kernel: tpu_custom_call.1
$region0: #{tpu_custom_call.1}
  #allocation0 [shape = 'u32[]', space=smem, size = 0x4, offset = 0x4, fixed_abs, tag = 'smem constant byte address 0x4 - core index']
  #allocation1 [shape = 'u32[144,128]{1,0:T(1,128)}', space=vmem, size = 0x12000, scoped, tag = 'internal scratch']
  %s0 = inlined_call_operand.vmem [shape: f32[32,8], index: 0, kind: input, shape index: {}]
  %s1 = inlined_call_operand.vmem [shape: f32[8,128], index: 1, kind: input, shape index: {}]
  %s2 = inlined_call_operand.vmem [shape: f32[32,128], index: 2, kind: input, shape index: {}]
  %s3 = inlined_call_operand.vmem [shape: f32[1,128], index: 3, kind: input, shape index: {}]
  %s4 = inlined_call_operand.vmem [shape: f32[32,8], index: 4, kind: input, shape index: {}]
  %s5 = inlined_call_operand.vmem [shape: f32[1,8], index: 5, kind: input, shape index: {}]
  %s6 = inlined_call_operand.vmem [shape: f32[32,8], index: 6, kind: output, shape index: {}]
  %s7 = sld [smem:[#allocation0]]
  $region34: #{tpu_custom_call.1} parent=0
    _
  %s9 = ssub.s32 1, %s7
  %s10 = scalar_select 0, %s9, %s7
  // Predicated region
  $region2: #{tpu_custom_call.1} parent=0 // pred_check
    _
  $region3: #{tpu_custom_call.1} parent=0 // pred_check_branch
    %12 = sbr.rel (0) target = $region5
  $region4: #{tpu_custom_call.1} parent=0 // pred_region
    _
  $region5: #{tpu_custom_call.1} parent=0 // pred_fallthru
    _
  // Predicated region
  $region6: #{tpu_custom_call.1} parent=0 // pred_check
    _
  $region7: #{tpu_custom_call.1} parent=0 // pred_check_branch
    %14 = sbr.rel (0) target = $region9
  $region8: #{tpu_custom_call.1} parent=0 // pred_region
    _
  $region9: #{tpu_custom_call.1} parent=0 // pred_fallthru
    _
  // Predicated region
  $region10: #{tpu_custom_call.1} parent=0 // pred_check
    _
  $region11: #{tpu_custom_call.1} parent=0 // pred_check_branch
    %16 = sbr.rel (0) target = $region13
  $region12: #{tpu_custom_call.1} parent=0 // pred_region
    _
  $region13: #{tpu_custom_call.1} parent=0 // pred_fallthru
    _
  // Predicated region
  $region14: #{tpu_custom_call.1} parent=0 // pred_check
    _
  $region15: #{tpu_custom_call.1} parent=0 // pred_check_branch
    %18 = sbr.rel (0) target = $region17
  $region16: #{tpu_custom_call.1} parent=0 // pred_region
    _
  $region17: #{tpu_custom_call.1} parent=0 // pred_fallthru
    _
  // Predicated region
  $region18: #{tpu_custom_call.1} parent=0 // pred_check
    _
  $region19: #{tpu_custom_call.1} parent=0 // pred_check_branch
    %20 = sbr.rel (0) target = $region21
  $region20: #{tpu_custom_call.1} parent=0 // pred_region
    _
  $region21: #{tpu_custom_call.1} parent=0 // pred_fallthru
    _
  // Predicated region
  $region22: #{tpu_custom_call.1} parent=0 // pred_check
    _
  $region23: #{tpu_custom_call.1} parent=0 // pred_check_branch
    %22 = sbr.rel (0) target = $region25
  $region24: #{tpu_custom_call.1} parent=0 // pred_region
    _
  $region25: #{tpu_custom_call.1} parent=0 // pred_fallthru
    _
  %v23 = vld [vmem:[%s0] sm:$0xff]
  %v24 = vld [vmem:[%s0 + $0x8] sm:$0xff]
  %v25 = vld [vmem:[%s0 + $0x10] sm:$0xff]
  %v26 = vld [vmem:[%s0 + $0x18] sm:$0xff]
  %v27 = vld [vmem:[%s1] sm:$0xff]
  %v28 = vld [vmem:[%s3] sm:$0x1]
  %v30 = vlaneseq
  %v31 = vshrl.u32 %v30, 7
  %v32 = vsub.s32 0, %v31
  %v33 = vrot.slane %v28, %v32
  %vm35 = vcmask 64512
  %v37 = vsel %vm35, %v23, 0
  %v40 = vsel %vm35, %v24, 0
  %v43 = vsel %vm35, %v25, 0
  %v46 = vsel %vm35, %v26, 0
  %48 = vmatprep.subr.mxu0 0.0
  %49 = vmatpush1.msra.mxu0 %v27
  %50 = vmatprep.subr.mxu0 0.0
  %51 = vmatpush1.msra.mxu0 0.0
  %52 = vmatprep.subr.mxu0 0.0
  %53 = vmatpush1.msra.mxu0 0.0
  %54 = vmatprep.subr.mxu0 0.0
  %55 = vmatpush1.msra.mxu0 0.0
  %56 = vmatprep.subr.mxu0 0.0
  %57 = vmatpush1.msra.mxu0 0.0
  %58 = vmatprep.subr.mxu0 0.0
  %59 = vmatpush1.msra.mxu0 0.0
  %60 = vmatprep.subr.mxu0 0.0
  %61 = vmatpush1.msra.mxu0 0.0
  %62 = vmatprep.subr.mxu0 0.0
  %63 = vmatpush1.msra.mxu0 0.0
  %64 = vmatprep.subr.mxu0 0.0
  %65 = vmatpush1.msra.mxu0 0.0
  %66 = vmatprep.subr.mxu0 0.0
  %67 = vmatpush1.msra.mxu0 0.0
  %68 = vmatprep.subr.mxu0 0.0
  %69 = vmatpush1.msra.mxu0 0.0
  %70 = vmatprep.subr.mxu0 0.0
  %71 = vmatpush1.msra.mxu0 0.0
  %72 = vmatprep.subr.mxu0 0.0
  %73 = vmatpush1.msra.mxu0 0.0
  %74 = vmatprep.subr.mxu0 0.0
  %75 = vmatpush1.msra.mxu0 0.0
  %76 = vmatprep.subr.mxu0 0.0
  %77 = vmatpush1.msra.mxu0 0.0
  %78 = vmatprep.subr.mxu0 0.0
  %79 = vmatpush1.msra.mxu0 0.0
  %80 = vmatprep.subr.mxu0 0.0
  %81 = vmatpush1.msra.mxu0 0.0
  %82 = vmatprep.subr.mxu0 0.0
  %83 = vmatpush1.msra.mxu0 0.0
  %84 = vmatprep.subr.mxu0 0.0
  %85 = vmatpush1.msra.mxu0 0.0
  %86 = vmatprep.subr.mxu0 0.0
  %87 = vmatpush1.msra.mxu0 0.0
  %88 = vmatprep.subr.mxu0 0.0
  %89 = vmatpush1.msra.mxu0 0.0
  %90 = vmatprep.subr.mxu0 0.0
  %91 = vmatpush1.msra.mxu0 0.0
  %92 = vmatprep.subr.mxu0 0.0
  %93 = vmatpush1.msra.mxu0 0.0
  %94 = vmatprep.subr.mxu0 0.0
  %95 = vmatpush1.msra.mxu0 0.0
  %96 = vmatprep.subr.mxu0 0.0
  %97 = vmatpush1.msra.mxu0 0.0
  %98 = vmatprep.subr.mxu0 0.0
  %99 = vmatpush1.msra.mxu0 0.0
  %100 = vmatprep.subr.mxu0 0.0
  %101 = vmatpush1.msra.mxu0 0.0
  %102 = vmatprep.subr.mxu0 0.0
  %103 = vmatpush1.msra.mxu0 0.0
  %104 = vmatprep.subr.mxu0 0.0
  %105 = vmatpush1.msra.mxu0 0.0
  %106 = vmatprep.subr.mxu0 0.0
  %107 = vmatpush1.msra.mxu0 0.0
  %108 = vmatprep.subr.mxu0 0.0
  %109 = vmatpush1.msra.mxu0 0.0
  %110 = vmatprep.subr.mxu0 0.0
  %111 = vmatpush1.msra.mxu0 0.0
  %112 = vmatprep.mubr.f32.mxu0 0.0
  %113 = vmatmul.mubr.f32.gmra.mrb[0].mxu0 %v37
  %v114 = vpop.f32.mrb[0].mxu0
  %v115 = vadd.f32 %v33, %v114
  %v116 = vpop.f32.mrb[0].mxu0
  %117 = vmatprep.mubr.f32.mxu0 0.0
  %118 = vmatmul.mubr.f32.gmra.mrb[0].mxu0 %v40
  %v119 = vpop.f32.mrb[0].mxu0
  %v120 = vadd.f32 %v33, %v119
  %v121 = vpop.f32.mrb[0].mxu0
  %122 = vmatprep.mubr.f32.mxu0 0.0
  %123 = vmatmul.mubr.f32.gmra.mrb[0].mxu0 %v43
  %v124 = vpop.f32.mrb[0].mxu0
  %v125 = vadd.f32 %v33, %v124
  %v126 = vpop.f32.mrb[0].mxu0
  %127 = vmatprep.mubr.f32.mxu0 0.0
  %128 = vmatmul.mubr.f32.gmra.mrb[0].mxu0 %v46
  %v129 = vpop.f32.mrb[0].mxu0
  %v130 = vadd.f32 %v33, %v129
  %v131 = vpop.f32.mrb[0].mxu0
  %132 = vdwg.mxu0
  %v133 = vld [vmem:[%s2] sm:$0xff]
  %v134 = vld [vmem:[%s2 + $0x8] sm:$0xff]
  %v135 = vld [vmem:[%s2 + $0x10] sm:$0xff]
  %v136 = vld [vmem:[%s2 + $0x18] sm:$0xff]
  %v137 = vlaneseq
  %v138 = vand.u32 %v137, 127
  %vm139 = vcmp.ge.s32.totalorder %v138, 64
  %vm140 = vcmp.lt.s32.totalorder %v138, 96
  %vm141 = vmand %vm139, %vm140
  %v142 = vsel %vm141, 1.0, 0.5
  %v143 = vsel %vm141, 0.0, 0.5
  %vm144 = vcmask 261120
  %v146 = vsel %vm144, 0.0, 0
  %148 = vmatprep.subr.mxu0 0.0
  %149 = vmatpush1.msra.mxu0 %v133
  %150 = vmatprep.subr.mxu0 0.0
  %151 = vmatpush1.msra.mxu0 %v134
  %152 = vmatprep.subr.mxu0 0.0
  %153 = vmatpush1.msra.mxu0 %v135
  %154 = vmatprep.subr.mxu0 0.0
  %155 = vmatpush1.msra.mxu0 %v136
  %156 = vmatprep.subr.mxu0 0.0
  %157 = vmatpush1.msra.mxu0 0.0
  %158 = vmatprep.subr.mxu0 0.0
  %159 = vmatpush1.msra.mxu0 0.0
  %160 = vmatprep.subr.mxu0 0.0
  %161 = vmatpush1.msra.mxu0 0.0
  %162 = vmatprep.subr.mxu0 0.0
  %163 = vmatpush1.msra.mxu0 0.0
  %164 = vmatprep.subr.mxu0 0.0
  %165 = vmatpush1.msra.mxu0 0.0
  %166 = vmatprep.subr.mxu0 0.0
  %167 = vmatpush1.msra.mxu0 0.0
  %168 = vmatprep.subr.mxu0 0.0
  %169 = vmatpush1.msra.mxu0 0.0
  %170 = vmatprep.subr.mxu0 0.0
  %171 = vmatpush1.msra.mxu0 0.0
  %172 = vmatprep.subr.mxu0 0.0
  %173 = vmatpush1.msra.mxu0 0.0
  %174 = vmatprep.subr.mxu0 0.0
  %175 = vmatpush1.msra.mxu0 0.0
  %176 = vmatprep.subr.mxu0 0.0
  %177 = vmatpush1.msra.mxu0 0.0
  %178 = vmatprep.subr.mxu0 0.0
  %179 = vmatpush1.msra.mxu0 0.0
  %180 = vmatprep.subr.mxu0 0.0
  %181 = vmatpush1.msra.mxu0 0.0
  %182 = vmatprep.subr.mxu0 0.0
  %183 = vmatpush1.msra.mxu0 0.0
  %184 = vmatprep.subr.mxu0 0.0
  %185 = vmatpush1.msra.mxu0 0.0
  %186 = vmatprep.subr.mxu0 0.0
  %187 = vmatpush1.msra.mxu0 0.0
  %188 = vmatprep.subr.mxu0 0.0
  %189 = vmatpush1.msra.mxu0 0.0
  %190 = vmatprep.subr.mxu0 0.0
  %191 = vmatpush1.msra.mxu0 0.0
  %192 = vmatprep.subr.mxu0 0.0
  %193 = vmatpush1.msra.mxu0 0.0
  %194 = vmatprep.subr.mxu0 0.0
  %195 = vmatpush1.msra.mxu0 0.0
  %196 = vmatprep.subr.mxu0 0.0
  %197 = vmatpush1.msra.mxu0 0.0
  %198 = vmatprep.subr.mxu0 0.0
  %199 = vmatpush1.msra.mxu0 0.0
  %200 = vmatprep.subr.mxu0 0.0
  %201 = vmatpush1.msra.mxu0 0.0
  %202 = vmatprep.subr.mxu0 0.0
  %203 = vmatpush1.msra.mxu0 0.0
  %204 = vmatprep.subr.mxu0 0.0
  %205 = vmatpush1.msra.mxu0 0.0
  %206 = vmatprep.subr.mxu0 0.0
  %207 = vmatpush1.msra.mxu0 0.0
  %208 = vmatprep.subr.mxu0 0.0
  %209 = vmatpush1.msra.mxu0 0.0
  %210 = vmatprep.subr.mxu0 0.0
  %211 = vmatpush1.msra.mxu0 0.0
  %212 = vmatprep.mubr.f32.mxu0 0.0
  %213 = vmatmul.mubr.f32.gmra.mrb[0].mxu0 %v146
  %v214 = vpop.f32.mrb[0].mxu0
  %v215 = vadd.f32 0.0, %v214
  %v216 = vpop.f32.mrb[0].mxu0
  %217 = vdwg.mxu0
  %v219 = vrot.slane %v215, 1
  %v222 = vadd.f32 %v115, %v215
  %v223 = vadd.f32 %v125, %v219
  %v224 = vtanh.pop %v222
  %v225 = vtanh.pop %v223
  %v226 = vmul.f32 %v224, %v142
  %v227 = vmul.f32 %v225, %v142
  %v228 = vadd.f32 %v226, %v143
  %v229 = vadd.f32 %v227, %v143
  %v230 = vmul.f32 %v228, 0.0
  %v231 = vmul.f32 %v229, 0.0
  %234 = vrot.lane.b32.xlu0 %v228, 64
  %v235 = vpop.permute.xlu0 %234
  %236 = vrot.lane.b32.xlu0 %v229, 64
  %v237 = vpop.permute.xlu0 %236
  %v240 = vmul.f32 %v228, %v235
  %v241 = vmul.f32 %v229, %v237
  %244 = vrot.lane.b32.xlu0 %v240, 32
  %v245 = vpop.permute.xlu0 %244
  %246 = vrot.lane.b32.xlu0 %v241, 32
  %v247 = vpop.permute.xlu0 %246
  %v250 = vadd.f32 %v230, %v245
  %v251 = vadd.f32 %v231, %v247
  %v252 = vtanh.pop %v250
  %v253 = vtanh.pop %v251
  %256 = vrot.lane.b32.xlu0 %v252, 64
  %v257 = vpop.permute.xlu0 %256
  %258 = vrot.lane.b32.xlu0 %v253, 64
  %v259 = vpop.permute.xlu0 %258
  %v262 = vmul.f32 %v228, %v257
  %v263 = vmul.f32 %v229, %v259
  %v266 = vrot.slane %v263, 7
  %vm267 = vcmask 1041409
  %v268 = vsel %vm267, %v266, %v262
  %269 = vrot.lane.b32.xlu0 %v268, 32
  %v270 = vpop.permute.xlu0 %269
  %v271 = vsel %vm144, %v270, 0
  %273 = vmatprep.subr.mxu0 0.0
  %274 = vmatpush1.msra.mxu0 %v133
  %275 = vmatprep.subr.mxu0 0.0
  %276 = vmatpush1.msra.mxu0 %v134
  %277 = vmatprep.subr.mxu0 0.0
  %278 = vmatpush1.msra.mxu0 %v135
  %279 = vmatprep.subr.mxu0 0.0
  %280 = vmatpush1.msra.mxu0 %v136
  %281 = vmatprep.subr.mxu0 0.0
  %282 = vmatpush1.msra.mxu0 0.0
  %283 = vmatprep.subr.mxu0 0.0
  %284 = vmatpush1.msra.mxu0 0.0
  %285 = vmatprep.subr.mxu0 0.0
  %286 = vmatpush1.msra.mxu0 0.0
  %287 = vmatprep.subr.mxu0 0.0
  %288 = vmatpush1.msra.mxu0 0.0
  %289 = vmatprep.subr.mxu0 0.0
  %290 = vmatpush1.msra.mxu0 0.0
  %291 = vmatprep.subr.mxu0 0.0
  %292 = vmatpush1.msra.mxu0 0.0
  %293 = vmatprep.subr.mxu0 0.0
  %294 = vmatpush1.msra.mxu0 0.0
  %295 = vmatprep.subr.mxu0 0.0
  %296 = vmatpush1.msra.mxu0 0.0
  %297 = vmatprep.subr.mxu0 0.0
  %298 = vmatpush1.msra.mxu0 0.0
  %299 = vmatprep.subr.mxu0 0.0
  %300 = vmatpush1.msra.mxu0 0.0
  %301 = vmatprep.subr.mxu0 0.0
  %302 = vmatpush1.msra.mxu0 0.0
  %303 = vmatprep.subr.mxu0 0.0
  %304 = vmatpush1.msra.mxu0 0.0
  %305 = vmatprep.subr.mxu0 0.0
  %306 = vmatpush1.msra.mxu0 0.0
  %307 = vmatprep.subr.mxu0 0.0
  %308 = vmatpush1.msra.mxu0 0.0
  %309 = vmatprep.subr.mxu0 0.0
  %310 = vmatpush1.msra.mxu0 0.0
  %311 = vmatprep.subr.mxu0 0.0
  %312 = vmatpush1.msra.mxu0 0.0
  %313 = vmatprep.subr.mxu0 0.0
  %314 = vmatpush1.msra.mxu0 0.0
  %315 = vmatprep.subr.mxu0 0.0
  %316 = vmatpush1.msra.mxu0 0.0
  %317 = vmatprep.subr.mxu0 0.0
  %318 = vmatpush1.msra.mxu0 0.0
  %319 = vmatprep.subr.mxu0 0.0
  %320 = vmatpush1.msra.mxu0 0.0
  %321 = vmatprep.subr.mxu0 0.0
  %322 = vmatpush1.msra.mxu0 0.0
  %323 = vmatprep.subr.mxu0 0.0
  %324 = vmatpush1.msra.mxu0 0.0
  %325 = vmatprep.subr.mxu0 0.0
  %326 = vmatpush1.msra.mxu0 0.0
  %327 = vmatprep.subr.mxu0 0.0
  %328 = vmatpush1.msra.mxu0 0.0
  %329 = vmatprep.subr.mxu0 0.0
  %330 = vmatpush1.msra.mxu0 0.0
  %331 = vmatprep.subr.mxu0 0.0
  %332 = vmatpush1.msra.mxu0 0.0
  %333 = vmatprep.subr.mxu0 0.0
  %334 = vmatpush1.msra.mxu0 0.0
  %335 = vmatprep.subr.mxu0 0.0
  %336 = vmatpush1.msra.mxu0 0.0
  %337 = vmatprep.mubr.f32.mxu0 0.0
  %338 = vmatmul.mubr.f32.gmra.mrb[0].mxu0 %v271
  %v339 = vpop.f32.mrb[0].mxu0
  %v340 = vadd.f32 0.0, %v339
  %v341 = vpop.f32.mrb[0].mxu0
  %342 = vdwg.mxu0
  %v344 = vrot.slane %v340, 7
  %v347 = vadd.f32 %v115, %v344
  %v348 = vadd.f32 %v125, %v340
  %v349 = vtanh.pop %v347
  %v350 = vtanh.pop %v348
  %v351 = vmul.f32 %v349, %v142
  %v352 = vmul.f32 %v350, %v142
  %v353 = vadd.f32 %v351, %v143
  %v354 = vadd.f32 %v352, %v143
  %v357 = vrot.slane %v250, 7
  %v358 = vrot.slane %v251, 7
  %v361 = vmul.f32 %v353, %v357
  %v362 = vmul.f32 %v354, %v358
  %365 = vrot.lane.b32.xlu0 %v353, 64
  %v366 = vpop.permute.xlu0 %365
  %367 = vrot.lane.b32.xlu0 %v354, 64
  %v368 = vpop.permute.xlu0 %367
  %v371 = vmul.f32 %v353, %v366
  %v372 = vmul.f32 %v354, %v368
  %375 = vrot.lane.b32.xlu0 %v371, 32
  %v376 = vpop.permute.xlu0 %375
  %377 = vrot.lane.b32.xlu0 %v372, 32
  %v378 = vpop.permute.xlu0 %377
  %v381 = vadd.f32 %v361, %v376
  %v382 = vadd.f32 %v362, %v378
  %v383 = vtanh.pop %v381
  %v384 = vtanh.pop %v382
  %387 = vrot.lane.b32.xlu0 %v383, 64
  %v388 = vpop.permute.xlu0 %387
  %389 = vrot.lane.b32.xlu0 %v384, 64
  %v390 = vpop.permute.xlu0 %389
  %v393 = vmul.f32 %v353, %v388
  %v394 = vmul.f32 %v354, %v390
  %v397 = vrot.slane %v393, 1
  %v398 = vsel %vm267, %v394, %v397
  %399 = vrot.lane.b32.xlu0 %v398, 32
  %v400 = vpop.permute.xlu0 %399
  %v401 = vsel %vm144, %v400, 0
  %403 = vmatprep.subr.mxu0 0.0
  %404 = vmatpush1.msra.mxu0 %v133
  %405 = vmatprep.subr.mxu0 0.0
  %406 = vmatpush1.msra.mxu0 %v134
  %407 = vmatprep.subr.mxu0 0.0
  %408 = vmatpush1.msra.mxu0 %v135
  %409 = vmatprep.subr.mxu0 0.0
  %410 = vmatpush1.msra.mxu0 %v136
  %411 = vmatprep.subr.mxu0 0.0
  %412 = vmatpush1.msra.mxu0 0.0
  %413 = vmatprep.subr.mxu0 0.0
  %414 = vmatpush1.msra.mxu0 0.0
  %415 = vmatprep.subr.mxu0 0.0
  %416 = vmatpush1.msra.mxu0 0.0
  %417 = vmatprep.subr.mxu0 0.0
  %418 = vmatpush1.msra.mxu0 0.0
  %419 = vmatprep.subr.mxu0 0.0
  %420 = vmatpush1.msra.mxu0 0.0
  %421 = vmatprep.subr.mxu0 0.0
  %422 = vmatpush1.msra.mxu0 0.0
  %423 = vmatprep.subr.mxu0 0.0
  %424 = vmatpush1.msra.mxu0 0.0
  %425 = vmatprep.subr.mxu0 0.0
  %426 = vmatpush1.msra.mxu0 0.0
  %427 = vmatprep.subr.mxu0 0.0
  %428 = vmatpush1.msra.mxu0 0.0
  %429 = vmatprep.subr.mxu0 0.0
  %430 = vmatpush1.msra.mxu0 0.0
  %431 = vmatprep.subr.mxu0 0.0
  %432 = vmatpush1.msra.mxu0 0.0
  %433 = vmatprep.subr.mxu0 0.0
  %434 = vmatpush1.msra.mxu0 0.0
  %435 = vmatprep.subr.mxu0 0.0
  %436 = vmatpush1.msra.mxu0 0.0
  %437 = vmatprep.subr.mxu0 0.0
  %438 = vmatpush1.msra.mxu0 0.0
  %439 = vmatprep.subr.mxu0 0.0
  %440 = vmatpush1.msra.mxu0 0.0
  %441 = vmatprep.subr.mxu0 0.0
  %442 = vmatpush1.msra.mxu0 0.0
  %443 = vmatprep.subr.mxu0 0.0
  %444 = vmatpush1.msra.mxu0 0.0
  %445 = vmatprep.subr.mxu0 0.0
  %446 = vmatpush1.msra.mxu0 0.0
  %447 = vmatprep.subr.mxu0 0.0
  %448 = vmatpush1.msra.mxu0 0.0
  %449 = vmatprep.subr.mxu0 0.0
  %450 = vmatpush1.msra.mxu0 0.0
  %451 = vmatprep.subr.mxu0 0.0
  %452 = vmatpush1.msra.mxu0 0.0
  %453 = vmatprep.subr.mxu0 0.0
  %454 = vmatpush1.msra.mxu0 0.0
  %455 = vmatprep.subr.mxu0 0.0
  %456 = vmatpush1.msra.mxu0 0.0
  %457 = vmatprep.subr.mxu0 0.0
  %458 = vmatpush1.msra.mxu0 0.0
  %459 = vmatprep.subr.mxu0 0.0
  %460 = vmatpush1.msra.mxu0 0.0
  %461 = vmatprep.subr.mxu0 0.0
  %462 = vmatpush1.msra.mxu0 0.0
  %463 = vmatprep.subr.mxu0 0.0
  %464 = vmatpush1.msra.mxu0 0.0
  %465 = vmatprep.subr.mxu0 0.0
  %466 = vmatpush1.msra.mxu0 0.0
  %467 = vmatprep.mubr.f32.mxu0 0.0
  %468 = vmatmul.mubr.f32.gmra.mrb[0].mxu0 %v401
  %v469 = vpop.f32.mrb[0].mxu0
  %v470 = vadd.f32 0.0, %v469
  %v471 = vpop.f32.mrb[0].mxu0
  %472 = vdwg.mxu0
  %v474 = vrot.slane %v470, 6
  %v475 = vrot.slane %v470, 7
  %v478 = vadd.f32 %v115, %v474
  %v479 = vadd.f32 %v125, %v475
  %v480 = vtanh.pop %v478
  %v481 = vtanh.pop %v479
  %v482 = vmul.f32 %v480, %v142
  %v483 = vmul.f32 %v481, %v142
  %v484 = vadd.f32 %v482, %v143
  %v485 = vadd.f32 %v483, %v143
  %v488 = vrot.slane %v381, 7
  %v489 = vrot.slane %v382, 7
  %v492 = vmul.f32 %v484, %v488
  %v493 = vmul.f32 %v485, %v489
  %496 = vrot.lane.b32.xlu0 %v484, 64
  %v497 = vpop.permute.xlu0 %496
  %498 = vrot.lane.b32.xlu0 %v485, 64
  %v499 = vpop.permute.xlu0 %498
  %v502 = vmul.f32 %v484, %v497
  %v503 = vmul.f32 %v485, %v499
  %506 = vrot.lane.b32.xlu0 %v502, 32
  %v507 = vpop.permute.xlu0 %506
  %508 = vrot.lane.b32.xlu0 %v503, 32
  %v509 = vpop.permute.xlu0 %508
  %v512 = vadd.f32 %v492, %v507
  %v513 = vadd.f32 %v493, %v509
  %v514 = vtanh.pop %v512
  %v515 = vtanh.pop %v513
  %518 = vrot.lane.b32.xlu0 %v514, 64
  %v519 = vpop.permute.xlu0 %518
  %520 = vrot.lane.b32.xlu0 %v515, 64
  %v521 = vpop.permute.xlu0 %520
  %v524 = vmul.f32 %v484, %v519
  %v525 = vmul.f32 %v485, %v521
  %v528 = vrot.slane %v524, 2
  %v529 = vrot.slane %v525, 1
  %v530 = vsel %vm267, %v529, %v528
  %531 = vrot.lane.b32.xlu0 %v530, 32
  %v532 = vpop.permute.xlu0 %531
  %v533 = vsel %vm144, %v532, 0
  %535 = vmatprep.subr.mxu0 0.0
  %536 = vmatpush1.msra.mxu0 %v133
  %537 = vmatprep.subr.mxu0 0.0
  %538 = vmatpush1.msra.mxu0 %v134
  %539 = vmatprep.subr.mxu0 0.0
  %540 = vmatpush1.msra.mxu0 %v135
  %541 = vmatprep.subr.mxu0 0.0
  %542 = vmatpush1.msra.mxu0 %v136
  %543 = vmatprep.subr.mxu0 0.0
  %544 = vmatpush1.msra.mxu0 0.0
  %545 = vmatprep.subr.mxu0 0.0
  %546 = vmatpush1.msra.mxu0 0.0
  %547 = vmatprep.subr.mxu0 0.0
  %548 = vmatpush1.msra.mxu0 0.0
  %549 = vmatprep.subr.mxu0 0.0
  %550 = vmatpush1.msra.mxu0 0.0
  %551 = vmatprep.subr.mxu0 0.0
  %552 = vmatpush1.msra.mxu0 0.0
  %553 = vmatprep.subr.mxu0 0.0
  %554 = vmatpush1.msra.mxu0 0.0
  %555 = vmatprep.subr.mxu0 0.0
  %556 = vmatpush1.msra.mxu0 0.0
  %557 = vmatprep.subr.mxu0 0.0
  %558 = vmatpush1.msra.mxu0 0.0
  %559 = vmatprep.subr.mxu0 0.0
  %560 = vmatpush1.msra.mxu0 0.0
  %561 = vmatprep.subr.mxu0 0.0
  %562 = vmatpush1.msra.mxu0 0.0
  %563 = vmatprep.subr.mxu0 0.0
  %564 = vmatpush1.msra.mxu0 0.0
  %565 = vmatprep.subr.mxu0 0.0
  %566 = vmatpush1.msra.mxu0 0.0
  %567 = vmatprep.subr.mxu0 0.0
  %568 = vmatpush1.msra.mxu0 0.0
  %569 = vmatprep.subr.mxu0 0.0
  %570 = vmatpush1.msra.mxu0 0.0
  %571 = vmatprep.subr.mxu0 0.0
  %572 = vmatpush1.msra.mxu0 0.0
  %573 = vmatprep.subr.mxu0 0.0
  %574 = vmatpush1.msra.mxu0 0.0
  %575 = vmatprep.subr.mxu0 0.0
  %576 = vmatpush1.msra.mxu0 0.0
  %577 = vmatprep.subr.mxu0 0.0
  %578 = vmatpush1.msra.mxu0 0.0
  %579 = vmatprep.subr.mxu0 0.0
  %580 = vmatpush1.msra.mxu0 0.0
  %581 = vmatprep.subr.mxu0 0.0
  %582 = vmatpush1.msra.mxu0 0.0
  %583 = vmatprep.subr.mxu0 0.0
  %584 = vmatpush1.msra.mxu0 0.0
  %585 = vmatprep.subr.mxu0 0.0
  %586 = vmatpush1.msra.mxu0 0.0
  %587 = vmatprep.subr.mxu0 0.0
  %588 = vmatpush1.msra.mxu0 0.0
  %589 = vmatprep.subr.mxu0 0.0
  %590 = vmatpush1.msra.mxu0 0.0
  %591 = vmatprep.subr.mxu0 0.0
  %592 = vmatpush1.msra.mxu0 0.0
  %593 = vmatprep.subr.mxu0 0.0
  %594 = vmatpush1.msra.mxu0 0.0
  %595 = vmatprep.subr.mxu0 0.0
  %596 = vmatpush1.msra.mxu0 0.0
  %597 = vmatprep.subr.mxu0 0.0
  %598 = vmatpush1.msra.mxu0 0.0
  %599 = vmatprep.mubr.f32.mxu0 0.0
  %600 = vmatmul.mubr.f32.gmra.mrb[0].mxu0 %v533
  %v601 = vpop.f32.mrb[0].mxu0
  %v602 = vadd.f32 0.0, %v601
  %v603 = vpop.f32.mrb[0].mxu0
  %604 = vdwg.mxu0
  %v606 = vrot.slane %v602, 5
  %v607 = vrot.slane %v602, 6
  %v610 = vadd.f32 %v115, %v606
  %v611 = vadd.f32 %v125, %v607
  %v612 = vtanh.pop %v610
  %v613 = vtanh.pop %v611
  %v614 = vmul.f32 %v612, %v142
  %v615 = vmul.f32 %v613, %v142
  %v616 = vadd.f32 %v614, %v143
  %v617 = vadd.f32 %v615, %v143
  %v620 = vrot.slane %v512, 7
  %v621 = vrot.slane %v513, 7
  %v624 = vmul.f32 %v616, %v620
  %v625 = vmul.f32 %v617, %v621
  %628 = vrot.lane.b32.xlu0 %v616, 64
  %v629 = vpop.permute.xlu0 %628
  %630 = vrot.lane.b32.xlu0 %v617, 64
  %v631 = vpop.permute.xlu0 %630
  %v634 = vmul.f32 %v616, %v629
  %v635 = vmul.f32 %v617, %v631
  %638 = vrot.lane.b32.xlu0 %v634, 32
  %v639 = vpop.permute.xlu0 %638
  %640 = vrot.lane.b32.xlu0 %v635, 32
  %v641 = vpop.permute.xlu0 %640
  %v644 = vadd.f32 %v624, %v639
  %v645 = vadd.f32 %v625, %v641
  %v646 = vtanh.pop %v644
  %v647 = vtanh.pop %v645
  %650 = vrot.lane.b32.xlu0 %v646, 64
  %v651 = vpop.permute.xlu0 %650
  %652 = vrot.lane.b32.xlu0 %v647, 64
  %v653 = vpop.permute.xlu0 %652
  %v656 = vmul.f32 %v616, %v651
  %v657 = vmul.f32 %v617, %v653
  %v660 = vrot.slane %v656, 3
  %v661 = vrot.slane %v657, 2
  %v662 = vsel %vm267, %v661, %v660
  %663 = vrot.lane.b32.xlu0 %v662, 32
  %v664 = vpop.permute.xlu0 %663
  %v665 = vsel %vm144, %v664, 0
  %667 = vmatprep.subr.mxu0 0.0
  %668 = vmatpush1.msra.mxu0 %v133
  %669 = vmatprep.subr.mxu0 0.0
  %670 = vmatpush1.msra.mxu0 %v134
  %671 = vmatprep.subr.mxu0 0.0
  %672 = vmatpush1.msra.mxu0 %v135
  %673 = vmatprep.subr.mxu0 0.0
  %674 = vmatpush1.msra.mxu0 %v136
  %675 = vmatprep.subr.mxu0 0.0
  %676 = vmatpush1.msra.mxu0 0.0
  %677 = vmatprep.subr.mxu0 0.0
  %678 = vmatpush1.msra.mxu0 0.0
  %679 = vmatprep.subr.mxu0 0.0
  %680 = vmatpush1.msra.mxu0 0.0
  %681 = vmatprep.subr.mxu0 0.0
  %682 = vmatpush1.msra.mxu0 0.0
  %683 = vmatprep.subr.mxu0 0.0
  %684 = vmatpush1.msra.mxu0 0.0
  %685 = vmatprep.subr.mxu0 0.0
  %686 = vmatpush1.msra.mxu0 0.0
  %687 = vmatprep.subr.mxu0 0.0
  %688 = vmatpush1.msra.mxu0 0.0
  %689 = vmatprep.subr.mxu0 0.0
  %690 = vmatpush1.msra.mxu0 0.0
  %691 = vmatprep.subr.mxu0 0.0
  %692 = vmatpush1.msra.mxu0 0.0
  %693 = vmatprep.subr.mxu0 0.0
  %694 = vmatpush1.msra.mxu0 0.0
  %695 = vmatprep.subr.mxu0 0.0
  %696 = vmatpush1.msra.mxu0 0.0
  %697 = vmatprep.subr.mxu0 0.0
  %698 = vmatpush1.msra.mxu0 0.0
  %699 = vmatprep.subr.mxu0 0.0
  %700 = vmatpush1.msra.mxu0 0.0
  %701 = vmatprep.subr.mxu0 0.0
  %702 = vmatpush1.msra.mxu0 0.0
  %703 = vmatprep.subr.mxu0 0.0
  %704 = vmatpush1.msra.mxu0 0.0
  %705 = vmatprep.subr.mxu0 0.0
  %706 = vmatpush1.msra.mxu0 0.0
  %707 = vmatprep.subr.mxu0 0.0
  %708 = vmatpush1.msra.mxu0 0.0
  %709 = vmatprep.subr.mxu0 0.0
  %710 = vmatpush1.msra.mxu0 0.0
  %711 = vmatprep.subr.mxu0 0.0
  %712 = vmatpush1.msra.mxu0 0.0
  %713 = vmatprep.subr.mxu0 0.0
  %714 = vmatpush1.msra.mxu0 0.0
  %715 = vmatprep.subr.mxu0 0.0
  %716 = vmatpush1.msra.mxu0 0.0
  %717 = vmatprep.subr.mxu0 0.0
  %718 = vmatpush1.msra.mxu0 0.0
  %719 = vmatprep.subr.mxu0 0.0
  %720 = vmatpush1.msra.mxu0 0.0
  %721 = vmatprep.subr.mxu0 0.0
  %722 = vmatpush1.msra.mxu0 0.0
  %723 = vmatprep.subr.mxu0 0.0
  %724 = vmatpush1.msra.mxu0 0.0
  %725 = vmatprep.subr.mxu0 0.0
  %726 = vmatpush1.msra.mxu0 0.0
  %727 = vmatprep.subr.mxu0 0.0
  %728 = vmatpush1.msra.mxu0 0.0
  %729 = vmatprep.subr.mxu0 0.0
  %730 = vmatpush1.msra.mxu0 0.0
  %731 = vmatprep.mubr.f32.mxu0 0.0
  %732 = vmatmul.mubr.f32.gmra.mrb[0].mxu0 %v665
  %v733 = vpop.f32.mrb[0].mxu0
  %v734 = vadd.f32 0.0, %v733
  %v735 = vpop.f32.mrb[0].mxu0
  %736 = vdwg.mxu0
  %v738 = vrot.slane %v734, 4
  %v739 = vrot.slane %v734, 5
  %v742 = vadd.f32 %v115, %v738
  %v743 = vadd.f32 %v125, %v739
  %v744 = vtanh.pop %v742
  %v745 = vtanh.pop %v743
  %v746 = vmul.f32 %v744, %v142
  %v747 = vmul.f32 %v745, %v142
  %v748 = vadd.f32 %v746, %v143
  %v749 = vadd.f32 %v747, %v143
  %v752 = vrot.slane %v644, 7
  %v753 = vrot.slane %v645, 7
  %v756 = vmul.f32 %v748, %v752
  %v757 = vmul.f32 %v749, %v753
  %760 = vrot.lane.b32.xlu0 %v748, 64
  %v761 = vpop.permute.xlu0 %760
  %762 = vrot.lane.b32.xlu0 %v749, 64
  %v763 = vpop.permute.xlu0 %762
  %v766 = vmul.f32 %v748, %v761
  %v767 = vmul.f32 %v749, %v763
  %770 = vrot.lane.b32.xlu0 %v766, 32
  %v771 = vpop.permute.xlu0 %770
  %772 = vrot.lane.b32.xlu0 %v767, 32
  %v773 = vpop.permute.xlu0 %772
  %v776 = vadd.f32 %v756, %v771
  %v777 = vadd.f32 %v757, %v773
  %v778 = vtanh.pop %v776
  %v779 = vtanh.pop %v777
  %782 = vrot.lane.b32.xlu0 %v778, 64
  %v783 = vpop.permute.xlu0 %782
  %784 = vrot.lane.b32.xlu0 %v779, 64
  %v785 = vpop.permute.xlu0 %784
  %v788 = vmul.f32 %v748, %v783
  %v789 = vmul.f32 %v749, %v785
  %v792 = vrot.slane %v788, 4
  %v793 = vrot.slane %v789, 3
  %v794 = vsel %vm267, %v793, %v792
  %795 = vrot.lane.b32.xlu0 %v794, 32
  %v796 = vpop.permute.xlu0 %795
  %v797 = vsel %vm144, %v796, 0
  %799 = vmatprep.subr.mxu0 0.0
  %800 = vmatpush1.msra.mxu0 %v133
  %801 = vmatprep.subr.mxu0 0.0
  %802 = vmatpush1.msra.mxu0 %v134
  %803 = vmatprep.subr.mxu0 0.0
  %804 = vmatpush1.msra.mxu0 %v135
  %805 = vmatprep.subr.mxu0 0.0
  %806 = vmatpush1.msra.mxu0 %v136
  %807 = vmatprep.subr.mxu0 0.0
  %808 = vmatpush1.msra.mxu0 0.0
  %809 = vmatprep.subr.mxu0 0.0
  %810 = vmatpush1.msra.mxu0 0.0
  %811 = vmatprep.subr.mxu0 0.0
  %812 = vmatpush1.msra.mxu0 0.0
  %813 = vmatprep.subr.mxu0 0.0
  %814 = vmatpush1.msra.mxu0 0.0
  %815 = vmatprep.subr.mxu0 0.0
  %816 = vmatpush1.msra.mxu0 0.0
  %817 = vmatprep.subr.mxu0 0.0
  %818 = vmatpush1.msra.mxu0 0.0
  %819 = vmatprep.subr.mxu0 0.0
  %820 = vmatpush1.msra.mxu0 0.0
  %821 = vmatprep.subr.mxu0 0.0
  %822 = vmatpush1.msra.mxu0 0.0
  %823 = vmatprep.subr.mxu0 0.0
  %824 = vmatpush1.msra.mxu0 0.0
  %825 = vmatprep.subr.mxu0 0.0
  %826 = vmatpush1.msra.mxu0 0.0
  %827 = vmatprep.subr.mxu0 0.0
  %828 = vmatpush1.msra.mxu0 0.0
  %829 = vmatprep.subr.mxu0 0.0
  %830 = vmatpush1.msra.mxu0 0.0
  %831 = vmatprep.subr.mxu0 0.0
  %832 = vmatpush1.msra.mxu0 0.0
  %833 = vmatprep.subr.mxu0 0.0
  %834 = vmatpush1.msra.mxu0 0.0
  %835 = vmatprep.subr.mxu0 0.0
  %836 = vmatpush1.msra.mxu0 0.0
  %837 = vmatprep.subr.mxu0 0.0
  %838 = vmatpush1.msra.mxu0 0.0
  %839 = vmatprep.subr.mxu0 0.0
  %840 = vmatpush1.msra.mxu0 0.0
  %841 = vmatprep.subr.mxu0 0.0
  %842 = vmatpush1.msra.mxu0 0.0
  %843 = vmatprep.subr.mxu0 0.0
  %844 = vmatpush1.msra.mxu0 0.0
  %845 = vmatprep.subr.mxu0 0.0
  %846 = vmatpush1.msra.mxu0 0.0
  %847 = vmatprep.subr.mxu0 0.0
  %848 = vmatpush1.msra.mxu0 0.0
  %849 = vmatprep.subr.mxu0 0.0
  %850 = vmatpush1.msra.mxu0 0.0
  %851 = vmatprep.subr.mxu0 0.0
  %852 = vmatpush1.msra.mxu0 0.0
  %853 = vmatprep.subr.mxu0 0.0
  %854 = vmatpush1.msra.mxu0 0.0
  %855 = vmatprep.subr.mxu0 0.0
  %856 = vmatpush1.msra.mxu0 0.0
  %857 = vmatprep.subr.mxu0 0.0
  %858 = vmatpush1.msra.mxu0 0.0
  %859 = vmatprep.subr.mxu0 0.0
  %860 = vmatpush1.msra.mxu0 0.0
  %861 = vmatprep.subr.mxu0 0.0
  %862 = vmatpush1.msra.mxu0 0.0
  %863 = vmatprep.mubr.f32.mxu0 0.0
  %864 = vmatmul.mubr.f32.gmra.mrb[0].mxu0 %v797
  %v865 = vpop.f32.mrb[0].mxu0
  %v866 = vadd.f32 0.0, %v865
  %v867 = vpop.f32.mrb[0].mxu0
  %868 = vdwg.mxu0
  %v870 = vrot.slane %v866, 3
  %v871 = vrot.slane %v866, 4
  %v874 = vadd.f32 %v115, %v870
  %v875 = vadd.f32 %v125, %v871
  %v876 = vtanh.pop %v874
  %v877 = vtanh.pop %v875
  %v878 = vmul.f32 %v876, %v142
  %v879 = vmul.f32 %v877, %v142
  %v880 = vadd.f32 %v878, %v143
  %v881 = vadd.f32 %v879, %v143
  %v884 = vrot.slane %v776, 7
  %v885 = vrot.slane %v777, 7
  %v888 = vmul.f32 %v880, %v884
  %v889 = vmul.f32 %v881, %v885
  %892 = vrot.lane.b32.xlu0 %v880, 64
  %v893 = vpop.permute.xlu0 %892
  %894 = vrot.lane.b32.xlu0 %v881, 64
  %v895 = vpop.permute.xlu0 %894
  %v898 = vmul.f32 %v880, %v893
  %v899 = vmul.f32 %v881, %v895
  %902 = vrot.lane.b32.xlu0 %v898, 32
  %v903 = vpop.permute.xlu0 %902
  %904 = vrot.lane.b32.xlu0 %v899, 32
  %v905 = vpop.permute.xlu0 %904
  %v908 = vadd.f32 %v888, %v903
  %v909 = vadd.f32 %v889, %v905
  %v910 = vtanh.pop %v908
  %v911 = vtanh.pop %v909
  %914 = vrot.lane.b32.xlu0 %v910, 64
  %v915 = vpop.permute.xlu0 %914
  %916 = vrot.lane.b32.xlu0 %v911, 64
  %v917 = vpop.permute.xlu0 %916
  %v920 = vmul.f32 %v880, %v915
  %v921 = vmul.f32 %v881, %v917
  %v924 = vrot.slane %v920, 5
  %v925 = vrot.slane %v921, 4
  %v926 = vsel %vm267, %v925, %v924
  %927 = vrot.lane.b32.xlu0 %v926, 32
  %v928 = vpop.permute.xlu0 %927
  %v929 = vsel %vm144, %v928, 0
  %931 = vmatprep.subr.mxu0 0.0
  %932 = vmatpush1.msra.mxu0 %v133
  %933 = vmatprep.subr.mxu0 0.0
  %934 = vmatpush1.msra.mxu0 %v134
  %935 = vmatprep.subr.mxu0 0.0
  %936 = vmatpush1.msra.mxu0 %v135
  %937 = vmatprep.subr.mxu0 0.0
  %938 = vmatpush1.msra.mxu0 %v136
  %939 = vmatprep.subr.mxu0 0.0
  %940 = vmatpush1.msra.mxu0 0.0
  %941 = vmatprep.subr.mxu0 0.0
  %942 = vmatpush1.msra.mxu0 0.0
  %943 = vmatprep.subr.mxu0 0.0
  %944 = vmatpush1.msra.mxu0 0.0
  %945 = vmatprep.subr.mxu0 0.0
  %946 = vmatpush1.msra.mxu0 0.0
  %947 = vmatprep.subr.mxu0 0.0
  %948 = vmatpush1.msra.mxu0 0.0
  %949 = vmatprep.subr.mxu0 0.0
  %950 = vmatpush1.msra.mxu0 0.0
  %951 = vmatprep.subr.mxu0 0.0
  %952 = vmatpush1.msra.mxu0 0.0
  %953 = vmatprep.subr.mxu0 0.0
  %954 = vmatpush1.msra.mxu0 0.0
  %955 = vmatprep.subr.mxu0 0.0
  %956 = vmatpush1.msra.mxu0 0.0
  %957 = vmatprep.subr.mxu0 0.0
  %958 = vmatpush1.msra.mxu0 0.0
  %959 = vmatprep.subr.mxu0 0.0
  %960 = vmatpush1.msra.mxu0 0.0
  %961 = vmatprep.subr.mxu0 0.0
  %962 = vmatpush1.msra.mxu0 0.0
  %963 = vmatprep.subr.mxu0 0.0
  %964 = vmatpush1.msra.mxu0 0.0
  %965 = vmatprep.subr.mxu0 0.0
  %966 = vmatpush1.msra.mxu0 0.0
  %967 = vmatprep.subr.mxu0 0.0
  %968 = vmatpush1.msra.mxu0 0.0
  %969 = vmatprep.subr.mxu0 0.0
  %970 = vmatpush1.msra.mxu0 0.0
  %971 = vmatprep.subr.mxu0 0.0
  %972 = vmatpush1.msra.mxu0 0.0
  %973 = vmatprep.subr.mxu0 0.0
  %974 = vmatpush1.msra.mxu0 0.0
  %975 = vmatprep.subr.mxu0 0.0
  %976 = vmatpush1.msra.mxu0 0.0
  %977 = vmatprep.subr.mxu0 0.0
  %978 = vmatpush1.msra.mxu0 0.0
  %979 = vmatprep.subr.mxu0 0.0
  %980 = vmatpush1.msra.mxu0 0.0
  %981 = vmatprep.subr.mxu0 0.0
  %982 = vmatpush1.msra.mxu0 0.0
  %983 = vmatprep.subr.mxu0 0.0
  %984 = vmatpush1.msra.mxu0 0.0
  %985 = vmatprep.subr.mxu0 0.0
  %986 = vmatpush1.msra.mxu0 0.0
  %987 = vmatprep.subr.mxu0 0.0
  %988 = vmatpush1.msra.mxu0 0.0
  %989 = vmatprep.subr.mxu0 0.0
  %990 = vmatpush1.msra.mxu0 0.0
  %991 = vmatprep.subr.mxu0 0.0
  %992 = vmatpush1.msra.mxu0 0.0
  %993 = vmatprep.subr.mxu0 0.0
  %994 = vmatpush1.msra.mxu0 0.0
  %995 = vmatprep.mubr.f32.mxu0 0.0
  %996 = vmatmul.mubr.f32.gmra.mrb[0].mxu0 %v929
  %v997 = vpop.f32.mrb[0].mxu0
  %v998 = vadd.f32 0.0, %v997
  %v999 = vpop.f32.mrb[0].mxu0
  %1000 = vdwg.mxu0
  %v1002 = vrot.slane %v998, 2
  %v1003 = vrot.slane %v998, 3
  %v1006 = vadd.f32 %v115, %v1002
  %v1007 = vadd.f32 %v125, %v1003
  %v1008 = vtanh.pop %v1006
  %v1009 = vtanh.pop %v1007
  %v1010 = vmul.f32 %v1008, %v142
  %v1011 = vmul.f32 %v1009, %v142
  %v1012 = vadd.f32 %v1010, %v143
  %v1013 = vadd.f32 %v1011, %v143
  %v1016 = vrot.slane %v908, 7
  %v1017 = vrot.slane %v909, 7
  %v1020 = vmul.f32 %v1012, %v1016
  %v1021 = vmul.f32 %v1013, %v1017
  %1024 = vrot.lane.b32.xlu0 %v1012, 64
  %v1025 = vpop.permute.xlu0 %1024
  %1026 = vrot.lane.b32.xlu0 %v1013, 64
  %v1027 = vpop.permute.xlu0 %1026
  %v1030 = vmul.f32 %v1012, %v1025
  %v1031 = vmul.f32 %v1013, %v1027
  %1034 = vrot.lane.b32.xlu0 %v1030, 32
  %v1035 = vpop.permute.xlu0 %1034
  %1036 = vrot.lane.b32.xlu0 %v1031, 32
  %v1037 = vpop.permute.xlu0 %1036
  %v1040 = vadd.f32 %v1020, %v1035
  %v1041 = vadd.f32 %v1021, %v1037
  %v1042 = vtanh.pop %v1040
  %v1043 = vtanh.pop %v1041
  %1046 = vrot.lane.b32.xlu0 %v1042, 64
  %v1047 = vpop.permute.xlu0 %1046
  %1048 = vrot.lane.b32.xlu0 %v1043, 64
  %v1049 = vpop.permute.xlu0 %1048
  %v1052 = vmul.f32 %v1012, %v1047
  %v1053 = vmul.f32 %v1013, %v1049
  %v1056 = vrot.slane %v1052, 6
  %v1057 = vrot.slane %v1053, 5
  %v1058 = vsel %vm267, %v1057, %v1056
  %1059 = vrot.lane.b32.xlu0 %v1058, 32
  %v1060 = vpop.permute.xlu0 %1059
  %v1061 = vsel %vm144, %v1060, 0
  %1063 = vmatprep.subr.mxu0 0.0
  %1064 = vmatpush1.msra.mxu0 %v133
  %1065 = vmatprep.subr.mxu0 0.0
  %1066 = vmatpush1.msra.mxu0 %v134
  %1067 = vmatprep.subr.mxu0 0.0
  %1068 = vmatpush1.msra.mxu0 %v135
  %1069 = vmatprep.subr.mxu0 0.0
  %1070 = vmatpush1.msra.mxu0 %v136
  %1071 = vmatprep.subr.mxu0 0.0
  %1072 = vmatpush1.msra.mxu0 0.0
  %1073 = vmatprep.subr.mxu0 0.0
  %1074 = vmatpush1.msra.mxu0 0.0
  %1075 = vmatprep.subr.mxu0 0.0
  %1076 = vmatpush1.msra.mxu0 0.0
  %1077 = vmatprep.subr.mxu0 0.0
  %1078 = vmatpush1.msra.mxu0 0.0
  %1079 = vmatprep.subr.mxu0 0.0
  %1080 = vmatpush1.msra.mxu0 0.0
  %1081 = vmatprep.subr.mxu0 0.0
  %1082 = vmatpush1.msra.mxu0 0.0
  %1083 = vmatprep.subr.mxu0 0.0
  %1084 = vmatpush1.msra.mxu0 0.0
  %1085 = vmatprep.subr.mxu0 0.0
  %1086 = vmatpush1.msra.mxu0 0.0
  %1087 = vmatprep.subr.mxu0 0.0
  %1088 = vmatpush1.msra.mxu0 0.0
  %1089 = vmatprep.subr.mxu0 0.0
  %1090 = vmatpush1.msra.mxu0 0.0
  %1091 = vmatprep.subr.mxu0 0.0
  %1092 = vmatpush1.msra.mxu0 0.0
  %1093 = vmatprep.subr.mxu0 0.0
  %1094 = vmatpush1.msra.mxu0 0.0
  %1095 = vmatprep.subr.mxu0 0.0
  %1096 = vmatpush1.msra.mxu0 0.0
  %1097 = vmatprep.subr.mxu0 0.0
  %1098 = vmatpush1.msra.mxu0 0.0
  %1099 = vmatprep.subr.mxu0 0.0
  %1100 = vmatpush1.msra.mxu0 0.0
  %1101 = vmatprep.subr.mxu0 0.0
  %1102 = vmatpush1.msra.mxu0 0.0
  %1103 = vmatprep.subr.mxu0 0.0
  %1104 = vmatpush1.msra.mxu0 0.0
  %1105 = vmatprep.subr.mxu0 0.0
  %1106 = vmatpush1.msra.mxu0 0.0
  %1107 = vmatprep.subr.mxu0 0.0
  %1108 = vmatpush1.msra.mxu0 0.0
  %1109 = vmatprep.subr.mxu0 0.0
  %1110 = vmatpush1.msra.mxu0 0.0
  %1111 = vmatprep.subr.mxu0 0.0
  %1112 = vmatpush1.msra.mxu0 0.0
  %1113 = vmatprep.subr.mxu0 0.0
  %1114 = vmatpush1.msra.mxu0 0.0
  %1115 = vmatprep.subr.mxu0 0.0
  %1116 = vmatpush1.msra.mxu0 0.0
  %1117 = vmatprep.subr.mxu0 0.0
  %1118 = vmatpush1.msra.mxu0 0.0
  %1119 = vmatprep.subr.mxu0 0.0
  %1120 = vmatpush1.msra.mxu0 0.0
  %1121 = vmatprep.subr.mxu0 0.0
  %1122 = vmatpush1.msra.mxu0 0.0
  %1123 = vmatprep.subr.mxu0 0.0
  %1124 = vmatpush1.msra.mxu0 0.0
  %1125 = vmatprep.subr.mxu0 0.0
  %1126 = vmatpush1.msra.mxu0 0.0
  %1127 = vmatprep.mubr.f32.mxu0 0.0
  %1128 = vmatmul.mubr.f32.gmra.mrb[0].mxu0 %v1061
  %v1129 = vpop.f32.mrb[0].mxu0
  %v1130 = vadd.f32 0.0, %v1129
  %v1131 = vpop.f32.mrb[0].mxu0
  %1132 = vdwg.mxu0
  %v1134 = vrot.slane %v1130, 1
  %v1135 = vrot.slane %v1130, 2
  %v1138 = vadd.f32 %v115, %v1134
  %v1139 = vadd.f32 %v125, %v1135
  %v1140 = vtanh.pop %v1138
  %v1141 = vtanh.pop %v1139
  %v1142 = vmul.f32 %v1140, %v142
  %v1143 = vmul.f32 %v1141, %v142
  %v1144 = vadd.f32 %v1142, %v143
  %v1145 = vadd.f32 %v1143, %v143
  %v1148 = vrot.slane %v1040, 7
  %v1149 = vrot.slane %v1041, 7
  %v1152 = vmul.f32 %v1144, %v1148
  %v1153 = vmul.f32 %v1145, %v1149
  %1156 = vrot.lane.b32.xlu0 %v1144, 64
  %v1157 = vpop.permute.xlu0 %1156
  %1158 = vrot.lane.b32.xlu0 %v1145, 64
  %v1159 = vpop.permute.xlu0 %1158
  %v1162 = vmul.f32 %v1144, %v1157
  %v1163 = vmul.f32 %v1145, %v1159
  %1166 = vrot.lane.b32.xlu0 %v1162, 32
  %v1167 = vpop.permute.xlu0 %1166
  %1168 = vrot.lane.b32.xlu0 %v1163, 32
  %v1169 = vpop.permute.xlu0 %1168
  %v1172 = vadd.f32 %v1152, %v1167
  %v1173 = vadd.f32 %v1153, %v1169
  %v1174 = vtanh.pop %v1172
  %v1175 = vtanh.pop %v1173
  %1178 = vrot.lane.b32.xlu0 %v1174, 64
  %v1179 = vpop.permute.xlu0 %1178
  %1180 = vrot.lane.b32.xlu0 %v1175, 64
  %v1181 = vpop.permute.xlu0 %1180
  %v1184 = vmul.f32 %v1144, %v1179
  %v1185 = vmul.f32 %v1145, %v1181
  %v1188 = vrot.slane %v1184, 7
  %v1189 = vrot.slane %v1185, 6
  %v1190 = vsel %vm267, %v1189, %v1188
  %1191 = vrot.lane.b32.xlu0 %v1190, 32
  %v1192 = vpop.permute.xlu0 %1191
  %v1193 = vsel %vm144, %v1192, 0
  %1195 = vmatprep.subr.mxu0 0.0
  %1196 = vmatpush1.msra.mxu0 %v133
  %1197 = vmatprep.subr.mxu0 0.0
  %1198 = vmatpush1.msra.mxu0 %v134
  %1199 = vmatprep.subr.mxu0 0.0
  %1200 = vmatpush1.msra.mxu0 %v135
  %1201 = vmatprep.subr.mxu0 0.0
  %1202 = vmatpush1.msra.mxu0 %v136
  %1203 = vmatprep.subr.mxu0 0.0
  %1204 = vmatpush1.msra.mxu0 0.0
  %1205 = vmatprep.subr.mxu0 0.0
  %1206 = vmatpush1.msra.mxu0 0.0
  %1207 = vmatprep.subr.mxu0 0.0
  %1208 = vmatpush1.msra.mxu0 0.0
  %1209 = vmatprep.subr.mxu0 0.0
  %1210 = vmatpush1.msra.mxu0 0.0
  %1211 = vmatprep.subr.mxu0 0.0
  %1212 = vmatpush1.msra.mxu0 0.0
  %1213 = vmatprep.subr.mxu0 0.0
  %1214 = vmatpush1.msra.mxu0 0.0
  %1215 = vmatprep.subr.mxu0 0.0
  %1216 = vmatpush1.msra.mxu0 0.0
  %1217 = vmatprep.subr.mxu0 0.0
  %1218 = vmatpush1.msra.mxu0 0.0
  %1219 = vmatprep.subr.mxu0 0.0
  %1220 = vmatpush1.msra.mxu0 0.0
  %1221 = vmatprep.subr.mxu0 0.0
  %1222 = vmatpush1.msra.mxu0 0.0
  %1223 = vmatprep.subr.mxu0 0.0
  %1224 = vmatpush1.msra.mxu0 0.0
  %1225 = vmatprep.subr.mxu0 0.0
  %1226 = vmatpush1.msra.mxu0 0.0
  %1227 = vmatprep.subr.mxu0 0.0
  %1228 = vmatpush1.msra.mxu0 0.0
  %1229 = vmatprep.subr.mxu0 0.0
  %1230 = vmatpush1.msra.mxu0 0.0
  %1231 = vmatprep.subr.mxu0 0.0
  %1232 = vmatpush1.msra.mxu0 0.0
  %1233 = vmatprep.subr.mxu0 0.0
  %1234 = vmatpush1.msra.mxu0 0.0
  %1235 = vmatprep.subr.mxu0 0.0
  %1236 = vmatpush1.msra.mxu0 0.0
  %1237 = vmatprep.subr.mxu0 0.0
  %1238 = vmatpush1.msra.mxu0 0.0
  %1239 = vmatprep.subr.mxu0 0.0
  %1240 = vmatpush1.msra.mxu0 0.0
  %1241 = vmatprep.subr.mxu0 0.0
  %1242 = vmatpush1.msra.mxu0 0.0
  %1243 = vmatprep.subr.mxu0 0.0
  %1244 = vmatpush1.msra.mxu0 0.0
  %1245 = vmatprep.subr.mxu0 0.0
  %1246 = vmatpush1.msra.mxu0 0.0
  %1247 = vmatprep.subr.mxu0 0.0
  %1248 = vmatpush1.msra.mxu0 0.0
  %1249 = vmatprep.subr.mxu0 0.0
  %1250 = vmatpush1.msra.mxu0 0.0
  %1251 = vmatprep.subr.mxu0 0.0
  %1252 = vmatpush1.msra.mxu0 0.0
  %1253 = vmatprep.subr.mxu0 0.0
  %1254 = vmatpush1.msra.mxu0 0.0
  %1255 = vmatprep.subr.mxu0 0.0
  %1256 = vmatpush1.msra.mxu0 0.0
  %1257 = vmatprep.subr.mxu0 0.0
  %1258 = vmatpush1.msra.mxu0 0.0
  %1259 = vmatprep.mubr.f32.mxu0 0.0
  %1260 = vmatmul.mubr.f32.gmra.mrb[0].mxu0 %v1193
  %v1261 = vpop.f32.mrb[0].mxu0
  %v1262 = vadd.f32 0.0, %v1261
  %v1263 = vpop.f32.mrb[0].mxu0
  %1264 = vdwg.mxu0
  %v1266 = vrot.slane %v1262, 1
  %v1269 = vadd.f32 %v120, %v1262
  %v1270 = vadd.f32 %v130, %v1266
  %v1271 = vtanh.pop %v1269
  %v1272 = vtanh.pop %v1270
  %v1273 = vmul.f32 %v1271, %v142
  %v1274 = vmul.f32 %v1272, %v142
  %v1275 = vadd.f32 %v1273, %v143
  %v1276 = vadd.f32 %v1274, %v143
  %v1279 = vrot.slane %v1172, 7
  %v1280 = vrot.slane %v1173, 7
  %v1283 = vmul.f32 %v1275, %v1279
  %v1284 = vmul.f32 %v1276, %v1280
  %1287 = vrot.lane.b32.xlu0 %v1275, 64
  %v1288 = vpop.permute.xlu0 %1287
  %1289 = vrot.lane.b32.xlu0 %v1276, 64
  %v1290 = vpop.permute.xlu0 %1289
  %v1293 = vmul.f32 %v1275, %v1288
  %v1294 = vmul.f32 %v1276, %v1290
  %1297 = vrot.lane.b32.xlu0 %v1293, 32
  %v1298 = vpop.permute.xlu0 %1297
  %1299 = vrot.lane.b32.xlu0 %v1294, 32
  %v1300 = vpop.permute.xlu0 %1299
  %v1303 = vadd.f32 %v1283, %v1298
  %v1304 = vadd.f32 %v1284, %v1300
  %v1305 = vtanh.pop %v1303
  %v1306 = vtanh.pop %v1304
  %1309 = vrot.lane.b32.xlu0 %v1305, 64
  %v1310 = vpop.permute.xlu0 %1309
  %1311 = vrot.lane.b32.xlu0 %v1306, 64
  %v1312 = vpop.permute.xlu0 %1311
  %v1315 = vmul.f32 %v1275, %v1310
  %v1316 = vmul.f32 %v1276, %v1312
  %v1319 = vrot.slane %v1316, 7
  %v1320 = vsel %vm267, %v1319, %v1315
  %1321 = vrot.lane.b32.xlu0 %v1320, 32
  %v1322 = vpop.permute.xlu0 %1321
  %v1323 = vsel %vm144, %v1322, 0
  %1325 = vmatprep.subr.mxu0 0.0
  %1326 = vmatpush1.msra.mxu0 %v133
  %1327 = vmatprep.subr.mxu0 0.0
  %1328 = vmatpush1.msra.mxu0 %v134
  %1329 = vmatprep.subr.mxu0 0.0
  %1330 = vmatpush1.msra.mxu0 %v135
  %1331 = vmatprep.subr.mxu0 0.0
  %1332 = vmatpush1.msra.mxu0 %v136
  %1333 = vmatprep.subr.mxu0 0.0
  %1334 = vmatpush1.msra.mxu0 0.0
  %1335 = vmatprep.subr.mxu0 0.0
  %1336 = vmatpush1.msra.mxu0 0.0
  %1337 = vmatprep.subr.mxu0 0.0
  %1338 = vmatpush1.msra.mxu0 0.0
  %1339 = vmatprep.subr.mxu0 0.0
  %1340 = vmatpush1.msra.mxu0 0.0
  %1341 = vmatprep.subr.mxu0 0.0
  %1342 = vmatpush1.msra.mxu0 0.0
  %1343 = vmatprep.subr.mxu0 0.0
  %1344 = vmatpush1.msra.mxu0 0.0
  %1345 = vmatprep.subr.mxu0 0.0
  %1346 = vmatpush1.msra.mxu0 0.0
  %1347 = vmatprep.subr.mxu0 0.0
  %1348 = vmatpush1.msra.mxu0 0.0
  %1349 = vmatprep.subr.mxu0 0.0
  %1350 = vmatpush1.msra.mxu0 0.0
  %1351 = vmatprep.subr.mxu0 0.0
  %1352 = vmatpush1.msra.mxu0 0.0
  %1353 = vmatprep.subr.mxu0 0.0
  %1354 = vmatpush1.msra.mxu0 0.0
  %1355 = vmatprep.subr.mxu0 0.0
  %1356 = vmatpush1.msra.mxu0 0.0
  %1357 = vmatprep.subr.mxu0 0.0
  %1358 = vmatpush1.msra.mxu0 0.0
  %1359 = vmatprep.subr.mxu0 0.0
  %1360 = vmatpush1.msra.mxu0 0.0
  %1361 = vmatprep.subr.mxu0 0.0
  %1362 = vmatpush1.msra.mxu0 0.0
  %1363 = vmatprep.subr.mxu0 0.0
  %1364 = vmatpush1.msra.mxu0 0.0
  %1365 = vmatprep.subr.mxu0 0.0
  %1366 = vmatpush1.msra.mxu0 0.0
  %1367 = vmatprep.subr.mxu0 0.0
  %1368 = vmatpush1.msra.mxu0 0.0
  %1369 = vmatprep.subr.mxu0 0.0
  %1370 = vmatpush1.msra.mxu0 0.0
  %1371 = vmatprep.subr.mxu0 0.0
  %1372 = vmatpush1.msra.mxu0 0.0
  %1373 = vmatprep.subr.mxu0 0.0
  %1374 = vmatpush1.msra.mxu0 0.0
  %1375 = vmatprep.subr.mxu0 0.0
  %1376 = vmatpush1.msra.mxu0 0.0
  %1377 = vmatprep.subr.mxu0 0.0
  %1378 = vmatpush1.msra.mxu0 0.0
  %1379 = vmatprep.subr.mxu0 0.0
  %1380 = vmatpush1.msra.mxu0 0.0
  %1381 = vmatprep.subr.mxu0 0.0
  %1382 = vmatpush1.msra.mxu0 0.0
  %1383 = vmatprep.subr.mxu0 0.0
  %1384 = vmatpush1.msra.mxu0 0.0
  %1385 = vmatprep.subr.mxu0 0.0
  %1386 = vmatpush1.msra.mxu0 0.0
  %1387 = vmatprep.subr.mxu0 0.0
  %1388 = vmatpush1.msra.mxu0 0.0
  %1389 = vmatprep.mubr.f32.mxu0 0.0
  %1390 = vmatmul.mubr.f32.gmra.mrb[0].mxu0 %v1323
  %v1391 = vpop.f32.mrb[0].mxu0
  %v1392 = vadd.f32 0.0, %v1391
  %v1393 = vpop.f32.mrb[0].mxu0
  %1394 = vdwg.mxu0
  %v1396 = vrot.slane %v1392, 7
  %v1399 = vadd.f32 %v120, %v1396
  %v1400 = vadd.f32 %v130, %v1392
  %v1401 = vtanh.pop %v1399
  %v1402 = vtanh.pop %v1400
  %v1403 = vmul.f32 %v1401, %v142
  %v1404 = vmul.f32 %v1402, %v142
  %v1405 = vadd.f32 %v1403, %v143
  %v1406 = vadd.f32 %v1404, %v143
  %v1409 = vrot.slane %v1303, 7
  %v1410 = vrot.slane %v1304, 7
  %v1413 = vmul.f32 %v1405, %v1409
  %v1414 = vmul.f32 %v1406, %v1410
  %1417 = vrot.lane.b32.xlu0 %v1405, 64
  %v1418 = vpop.permute.xlu0 %1417
  %1419 = vrot.lane.b32.xlu0 %v1406, 64
  %v1420 = vpop.permute.xlu0 %1419
  %v1423 = vmul.f32 %v1405, %v1418
  %v1424 = vmul.f32 %v1406, %v1420
  %1427 = vrot.lane.b32.xlu0 %v1423, 32
  %v1428 = vpop.permute.xlu0 %1427
  %1429 = vrot.lane.b32.xlu0 %v1424, 32
  %v1430 = vpop.permute.xlu0 %1429
  %v1433 = vadd.f32 %v1413, %v1428
  %v1434 = vadd.f32 %v1414, %v1430
  %v1435 = vtanh.pop %v1433
  %v1436 = vtanh.pop %v1434
  %1439 = vrot.lane.b32.xlu0 %v1435, 64
  %v1440 = vpop.permute.xlu0 %1439
  %1441 = vrot.lane.b32.xlu0 %v1436, 64
  %v1442 = vpop.permute.xlu0 %1441
  %v1445 = vmul.f32 %v1405, %v1440
  %v1446 = vmul.f32 %v1406, %v1442
  %v1449 = vrot.slane %v1445, 1
  %v1450 = vsel %vm267, %v1446, %v1449
  %1451 = vrot.lane.b32.xlu0 %v1450, 32
  %v1452 = vpop.permute.xlu0 %1451
  %v1453 = vsel %vm144, %v1452, 0
  %1455 = vmatprep.subr.mxu0 0.0
  %1456 = vmatpush1.msra.mxu0 %v133
  %1457 = vmatprep.subr.mxu0 0.0
  %1458 = vmatpush1.msra.mxu0 %v134
  %1459 = vmatprep.subr.mxu0 0.0
  %1460 = vmatpush1.msra.mxu0 %v135
  %1461 = vmatprep.subr.mxu0 0.0
  %1462 = vmatpush1.msra.mxu0 %v136
  %1463 = vmatprep.subr.mxu0 0.0
  %1464 = vmatpush1.msra.mxu0 0.0
  %1465 = vmatprep.subr.mxu0 0.0
  %1466 = vmatpush1.msra.mxu0 0.0
  %1467 = vmatprep.subr.mxu0 0.0
  %1468 = vmatpush1.msra.mxu0 0.0
  %1469 = vmatprep.subr.mxu0 0.0
  %1470 = vmatpush1.msra.mxu0 0.0
  %1471 = vmatprep.subr.mxu0 0.0
  %1472 = vmatpush1.msra.mxu0 0.0
  %1473 = vmatprep.subr.mxu0 0.0
  %1474 = vmatpush1.msra.mxu0 0.0
  %1475 = vmatprep.subr.mxu0 0.0
  %1476 = vmatpush1.msra.mxu0 0.0
  %1477 = vmatprep.subr.mxu0 0.0
  %1478 = vmatpush1.msra.mxu0 0.0
  %1479 = vmatprep.subr.mxu0 0.0
  %1480 = vmatpush1.msra.mxu0 0.0
  %1481 = vmatprep.subr.mxu0 0.0
  %1482 = vmatpush1.msra.mxu0 0.0
  %1483 = vmatprep.subr.mxu0 0.0
  %1484 = vmatpush1.msra.mxu0 0.0
  %1485 = vmatprep.subr.mxu0 0.0
  %1486 = vmatpush1.msra.mxu0 0.0
  %1487 = vmatprep.subr.mxu0 0.0
  %1488 = vmatpush1.msra.mxu0 0.0
  %1489 = vmatprep.subr.mxu0 0.0
  %1490 = vmatpush1.msra.mxu0 0.0
  %1491 = vmatprep.subr.mxu0 0.0
  %1492 = vmatpush1.msra.mxu0 0.0
  %1493 = vmatprep.subr.mxu0 0.0
  %1494 = vmatpush1.msra.mxu0 0.0
  %1495 = vmatprep.subr.mxu0 0.0
  %1496 = vmatpush1.msra.mxu0 0.0
  %1497 = vmatprep.subr.mxu0 0.0
  %1498 = vmatpush1.msra.mxu0 0.0
  %1499 = vmatprep.subr.mxu0 0.0
  %1500 = vmatpush1.msra.mxu0 0.0
  %1501 = vmatprep.subr.mxu0 0.0
  %1502 = vmatpush1.msra.mxu0 0.0
  %1503 = vmatprep.subr.mxu0 0.0
  %1504 = vmatpush1.msra.mxu0 0.0
  %1505 = vmatprep.subr.mxu0 0.0
  %1506 = vmatpush1.msra.mxu0 0.0
  %1507 = vmatprep.subr.mxu0 0.0
  %1508 = vmatpush1.msra.mxu0 0.0
  %1509 = vmatprep.subr.mxu0 0.0
  %1510 = vmatpush1.msra.mxu0 0.0
  %1511 = vmatprep.subr.mxu0 0.0
  %1512 = vmatpush1.msra.mxu0 0.0
  %1513 = vmatprep.subr.mxu0 0.0
  %1514 = vmatpush1.msra.mxu0 0.0
  %1515 = vmatprep.subr.mxu0 0.0
  %1516 = vmatpush1.msra.mxu0 0.0
  %1517 = vmatprep.subr.mxu0 0.0
  %1518 = vmatpush1.msra.mxu0 0.0
  %1519 = vmatprep.mubr.f32.mxu0 0.0
  %1520 = vmatmul.mubr.f32.gmra.mrb[0].mxu0 %v1453
  %v1521 = vpop.f32.mrb[0].mxu0
  %v1522 = vadd.f32 0.0, %v1521
  %v1523 = vpop.f32.mrb[0].mxu0
  %1524 = vdwg.mxu0
  %v1526 = vrot.slane %v1522, 6
  %v1527 = vrot.slane %v1522, 7
  %v1530 = vadd.f32 %v120, %v1526
  %v1531 = vadd.f32 %v130, %v1527
  %v1532 = vtanh.pop %v1530
  %v1533 = vtanh.pop %v1531
  %v1534 = vmul.f32 %v1532, %v142
  %v1535 = vmul.f32 %v1533, %v142
  %v1536 = vadd.f32 %v1534, %v143
  %v1537 = vadd.f32 %v1535, %v143
  %v1540 = vrot.slane %v1433, 7
  %v1541 = vrot.slane %v1434, 7
  %v1544 = vmul.f32 %v1536, %v1540
  %v1545 = vmul.f32 %v1537, %v1541
  %1548 = vrot.lane.b32.xlu0 %v1536, 64
  %v1549 = vpop.permute.xlu0 %1548
  %1550 = vrot.lane.b32.xlu0 %v1537, 64
  %v1551 = vpop.permute.xlu0 %1550
  %v1554 = vmul.f32 %v1536, %v1549
  %v1555 = vmul.f32 %v1537, %v1551
  %1558 = vrot.lane.b32.xlu0 %v1554, 32
  %v1559 = vpop.permute.xlu0 %1558
  %1560 = vrot.lane.b32.xlu0 %v1555, 32
  %v1561 = vpop.permute.xlu0 %1560
  %v1564 = vadd.f32 %v1544, %v1559
  %v1565 = vadd.f32 %v1545, %v1561
  %v1566 = vtanh.pop %v1564
  %v1567 = vtanh.pop %v1565
  %1570 = vrot.lane.b32.xlu0 %v1566, 64
  %v1571 = vpop.permute.xlu0 %1570
  %1572 = vrot.lane.b32.xlu0 %v1567, 64
  %v1573 = vpop.permute.xlu0 %1572
  %v1576 = vmul.f32 %v1536, %v1571
  %v1577 = vmul.f32 %v1537, %v1573
  %v1580 = vrot.slane %v1576, 2
  %v1581 = vrot.slane %v1577, 1
  %v1582 = vsel %vm267, %v1581, %v1580
  %1583 = vrot.lane.b32.xlu0 %v1582, 32
  %v1584 = vpop.permute.xlu0 %1583
  %v1585 = vsel %vm144, %v1584, 0
  %1587 = vmatprep.subr.mxu0 0.0
  %1588 = vmatpush1.msra.mxu0 %v133
  %1589 = vmatprep.subr.mxu0 0.0
  %1590 = vmatpush1.msra.mxu0 %v134
  %1591 = vmatprep.subr.mxu0 0.0
  %1592 = vmatpush1.msra.mxu0 %v135
  %1593 = vmatprep.subr.mxu0 0.0
  %1594 = vmatpush1.msra.mxu0 %v136
  %1595 = vmatprep.subr.mxu0 0.0
  %1596 = vmatpush1.msra.mxu0 0.0
  %1597 = vmatprep.subr.mxu0 0.0
  %1598 = vmatpush1.msra.mxu0 0.0
  %1599 = vmatprep.subr.mxu0 0.0
  %1600 = vmatpush1.msra.mxu0 0.0
  %1601 = vmatprep.subr.mxu0 0.0
  %1602 = vmatpush1.msra.mxu0 0.0
  %1603 = vmatprep.subr.mxu0 0.0
  %1604 = vmatpush1.msra.mxu0 0.0
  %1605 = vmatprep.subr.mxu0 0.0
  %1606 = vmatpush1.msra.mxu0 0.0
  %1607 = vmatprep.subr.mxu0 0.0
  %1608 = vmatpush1.msra.mxu0 0.0
  %1609 = vmatprep.subr.mxu0 0.0
  %1610 = vmatpush1.msra.mxu0 0.0
  %1611 = vmatprep.subr.mxu0 0.0
  %1612 = vmatpush1.msra.mxu0 0.0
  %1613 = vmatprep.subr.mxu0 0.0
  %1614 = vmatpush1.msra.mxu0 0.0
  %1615 = vmatprep.subr.mxu0 0.0
  %1616 = vmatpush1.msra.mxu0 0.0
  %1617 = vmatprep.subr.mxu0 0.0
  %1618 = vmatpush1.msra.mxu0 0.0
  %1619 = vmatprep.subr.mxu0 0.0
  %1620 = vmatpush1.msra.mxu0 0.0
  %1621 = vmatprep.subr.mxu0 0.0
  %1622 = vmatpush1.msra.mxu0 0.0
  %1623 = vmatprep.subr.mxu0 0.0
  %1624 = vmatpush1.msra.mxu0 0.0
  %1625 = vmatprep.subr.mxu0 0.0
  %1626 = vmatpush1.msra.mxu0 0.0
  %1627 = vmatprep.subr.mxu0 0.0
  %1628 = vmatpush1.msra.mxu0 0.0
  %1629 = vmatprep.subr.mxu0 0.0
  %1630 = vmatpush1.msra.mxu0 0.0
  %1631 = vmatprep.subr.mxu0 0.0
  %1632 = vmatpush1.msra.mxu0 0.0
  %1633 = vmatprep.subr.mxu0 0.0
  %1634 = vmatpush1.msra.mxu0 0.0
  %1635 = vmatprep.subr.mxu0 0.0
  %1636 = vmatpush1.msra.mxu0 0.0
  %1637 = vmatprep.subr.mxu0 0.0
  %1638 = vmatpush1.msra.mxu0 0.0
  %1639 = vmatprep.subr.mxu0 0.0
  %1640 = vmatpush1.msra.mxu0 0.0
  %1641 = vmatprep.subr.mxu0 0.0
  %1642 = vmatpush1.msra.mxu0 0.0
  %1643 = vmatprep.subr.mxu0 0.0
  %1644 = vmatpush1.msra.mxu0 0.0
  %1645 = vmatprep.subr.mxu0 0.0
  %1646 = vmatpush1.msra.mxu0 0.0
  %1647 = vmatprep.subr.mxu0 0.0
  %1648 = vmatpush1.msra.mxu0 0.0
  %1649 = vmatprep.subr.mxu0 0.0
  %1650 = vmatpush1.msra.mxu0 0.0
  %1651 = vmatprep.mubr.f32.mxu0 0.0
  %1652 = vmatmul.mubr.f32.gmra.mrb[0].mxu0 %v1585
  %v1653 = vpop.f32.mrb[0].mxu0
  %v1654 = vadd.f32 0.0, %v1653
  %v1655 = vpop.f32.mrb[0].mxu0
  %1656 = vdwg.mxu0
  %v1658 = vrot.slane %v1654, 5
  %v1659 = vrot.slane %v1654, 6
  %v1662 = vadd.f32 %v120, %v1658
  %v1663 = vadd.f32 %v130, %v1659
  %v1664 = vtanh.pop %v1662
  %v1665 = vtanh.pop %v1663
  %v1666 = vmul.f32 %v1664, %v142
  %v1667 = vmul.f32 %v1665, %v142
  %v1668 = vadd.f32 %v1666, %v143
  %v1669 = vadd.f32 %v1667, %v143
  %v1672 = vrot.slane %v1564, 7
  %v1673 = vrot.slane %v1565, 7
  %v1676 = vmul.f32 %v1668, %v1672
  %v1677 = vmul.f32 %v1669, %v1673
  %1680 = vrot.lane.b32.xlu0 %v1668, 64
  %v1681 = vpop.permute.xlu0 %1680
  %1682 = vrot.lane.b32.xlu0 %v1669, 64
  %v1683 = vpop.permute.xlu0 %1682
  %v1686 = vmul.f32 %v1668, %v1681
  %v1687 = vmul.f32 %v1669, %v1683
  %1690 = vrot.lane.b32.xlu0 %v1686, 32
  %v1691 = vpop.permute.xlu0 %1690
  %1692 = vrot.lane.b32.xlu0 %v1687, 32
  %v1693 = vpop.permute.xlu0 %1692
  %v1696 = vadd.f32 %v1676, %v1691
  %v1697 = vadd.f32 %v1677, %v1693
  %v1698 = vtanh.pop %v1696
  %v1699 = vtanh.pop %v1697
  %1702 = vrot.lane.b32.xlu0 %v1698, 64
  %v1703 = vpop.permute.xlu0 %1702
  %1704 = vrot.lane.b32.xlu0 %v1699, 64
  %v1705 = vpop.permute.xlu0 %1704
  %v1708 = vmul.f32 %v1668, %v1703
  %v1709 = vmul.f32 %v1669, %v1705
  %v1712 = vrot.slane %v1708, 3
  %v1713 = vrot.slane %v1709, 2
  %v1714 = vsel %vm267, %v1713, %v1712
  %1715 = vrot.lane.b32.xlu0 %v1714, 32
  %v1716 = vpop.permute.xlu0 %1715
  %v1717 = vsel %vm144, %v1716, 0
  %1719 = vmatprep.subr.mxu0 0.0
  %1720 = vmatpush1.msra.mxu0 %v133
  %1721 = vmatprep.subr.mxu0 0.0
  %1722 = vmatpush1.msra.mxu0 %v134
  %1723 = vmatprep.subr.mxu0 0.0
  %1724 = vmatpush1.msra.mxu0 %v135
  %1725 = vmatprep.subr.mxu0 0.0
  %1726 = vmatpush1.msra.mxu0 %v136
  %1727 = vmatprep.subr.mxu0 0.0
  %1728 = vmatpush1.msra.mxu0 0.0
  %1729 = vmatprep.subr.mxu0 0.0
  %1730 = vmatpush1.msra.mxu0 0.0
  %1731 = vmatprep.subr.mxu0 0.0
  %1732 = vmatpush1.msra.mxu0 0.0
  %1733 = vmatprep.subr.mxu0 0.0
  %1734 = vmatpush1.msra.mxu0 0.0
  %1735 = vmatprep.subr.mxu0 0.0
  %1736 = vmatpush1.msra.mxu0 0.0
  %1737 = vmatprep.subr.mxu0 0.0
  %1738 = vmatpush1.msra.mxu0 0.0
  %1739 = vmatprep.subr.mxu0 0.0
  %1740 = vmatpush1.msra.mxu0 0.0
  %1741 = vmatprep.subr.mxu0 0.0
  %1742 = vmatpush1.msra.mxu0 0.0
  %1743 = vmatprep.subr.mxu0 0.0
  %1744 = vmatpush1.msra.mxu0 0.0
  %1745 = vmatprep.subr.mxu0 0.0
  %1746 = vmatpush1.msra.mxu0 0.0
  %1747 = vmatprep.subr.mxu0 0.0
  %1748 = vmatpush1.msra.mxu0 0.0
  %1749 = vmatprep.subr.mxu0 0.0
  %1750 = vmatpush1.msra.mxu0 0.0
  %1751 = vmatprep.subr.mxu0 0.0
  %1752 = vmatpush1.msra.mxu0 0.0
  %1753 = vmatprep.subr.mxu0 0.0
  %1754 = vmatpush1.msra.mxu0 0.0
  %1755 = vmatprep.subr.mxu0 0.0
  %1756 = vmatpush1.msra.mxu0 0.0
  %1757 = vmatprep.subr.mxu0 0.0
  %1758 = vmatpush1.msra.mxu0 0.0
  %1759 = vmatprep.subr.mxu0 0.0
  %1760 = vmatpush1.msra.mxu0 0.0
  %1761 = vmatprep.subr.mxu0 0.0
  %1762 = vmatpush1.msra.mxu0 0.0
  %1763 = vmatprep.subr.mxu0 0.0
  %1764 = vmatpush1.msra.mxu0 0.0
  %1765 = vmatprep.subr.mxu0 0.0
  %1766 = vmatpush1.msra.mxu0 0.0
  %1767 = vmatprep.subr.mxu0 0.0
  %1768 = vmatpush1.msra.mxu0 0.0
  %1769 = vmatprep.subr.mxu0 0.0
  %1770 = vmatpush1.msra.mxu0 0.0
  %1771 = vmatprep.subr.mxu0 0.0
  %1772 = vmatpush1.msra.mxu0 0.0
  %1773 = vmatprep.subr.mxu0 0.0
  %1774 = vmatpush1.msra.mxu0 0.0
  %1775 = vmatprep.subr.mxu0 0.0
  %1776 = vmatpush1.msra.mxu0 0.0
  %1777 = vmatprep.subr.mxu0 0.0
  %1778 = vmatpush1.msra.mxu0 0.0
  %1779 = vmatprep.subr.mxu0 0.0
  %1780 = vmatpush1.msra.mxu0 0.0
  %1781 = vmatprep.subr.mxu0 0.0
  %1782 = vmatpush1.msra.mxu0 0.0
  %1783 = vmatprep.mubr.f32.mxu0 0.0
  %1784 = vmatmul.mubr.f32.gmra.mrb[0].mxu0 %v1717
  %v1785 = vpop.f32.mrb[0].mxu0
  %v1786 = vadd.f32 0.0, %v1785
  %v1787 = vpop.f32.mrb[0].mxu0
  %1788 = vdwg.mxu0
  %v1790 = vrot.slane %v1786, 4
  %v1791 = vrot.slane %v1786, 5
  %v1794 = vadd.f32 %v120, %v1790
  %v1795 = vadd.f32 %v130, %v1791
  %v1796 = vtanh.pop %v1794
  %v1797 = vtanh.pop %v1795
  %v1798 = vmul.f32 %v1796, %v142
  %v1799 = vmul.f32 %v1797, %v142
  %v1800 = vadd.f32 %v1798, %v143
  %v1801 = vadd.f32 %v1799, %v143
  %v1804 = vrot.slane %v1696, 7
  %v1805 = vrot.slane %v1697, 7
  %v1808 = vmul.f32 %v1800, %v1804
  %v1809 = vmul.f32 %v1801, %v1805
  %1812 = vrot.lane.b32.xlu0 %v1800, 64
  %v1813 = vpop.permute.xlu0 %1812
  %1814 = vrot.lane.b32.xlu0 %v1801, 64
  %v1815 = vpop.permute.xlu0 %1814
  %v1818 = vmul.f32 %v1800, %v1813
  %v1819 = vmul.f32 %v1801, %v1815
  %1822 = vrot.lane.b32.xlu0 %v1818, 32
  %v1823 = vpop.permute.xlu0 %1822
  %1824 = vrot.lane.b32.xlu0 %v1819, 32
  %v1825 = vpop.permute.xlu0 %1824
  %v1828 = vadd.f32 %v1808, %v1823
  %v1829 = vadd.f32 %v1809, %v1825
  %v1830 = vtanh.pop %v1828
  %v1831 = vtanh.pop %v1829
  %1834 = vrot.lane.b32.xlu0 %v1830, 64
  %v1835 = vpop.permute.xlu0 %1834
  %1836 = vrot.lane.b32.xlu0 %v1831, 64
  %v1837 = vpop.permute.xlu0 %1836
  %v1840 = vmul.f32 %v1800, %v1835
  %v1841 = vmul.f32 %v1801, %v1837
  %v1844 = vrot.slane %v1840, 4
  %v1845 = vrot.slane %v1841, 3
  %v1846 = vsel %vm267, %v1845, %v1844
  %1847 = vrot.lane.b32.xlu0 %v1846, 32
  %v1848 = vpop.permute.xlu0 %1847
  %v1849 = vsel %vm144, %v1848, 0
  %1851 = vmatprep.subr.mxu0 0.0
  %1852 = vmatpush1.msra.mxu0 %v133
  %1853 = vmatprep.subr.mxu0 0.0
  %1854 = vmatpush1.msra.mxu0 %v134
  %1855 = vmatprep.subr.mxu0 0.0
  %1856 = vmatpush1.msra.mxu0 %v135
  %1857 = vmatprep.subr.mxu0 0.0
  %1858 = vmatpush1.msra.mxu0 %v136
  %1859 = vmatprep.subr.mxu0 0.0
  %1860 = vmatpush1.msra.mxu0 0.0
  %1861 = vmatprep.subr.mxu0 0.0
  %1862 = vmatpush1.msra.mxu0 0.0
  %1863 = vmatprep.subr.mxu0 0.0
  %1864 = vmatpush1.msra.mxu0 0.0
  %1865 = vmatprep.subr.mxu0 0.0
  %1866 = vmatpush1.msra.mxu0 0.0
  %1867 = vmatprep.subr.mxu0 0.0
  %1868 = vmatpush1.msra.mxu0 0.0
  %1869 = vmatprep.subr.mxu0 0.0
  %1870 = vmatpush1.msra.mxu0 0.0
  %1871 = vmatprep.subr.mxu0 0.0
  %1872 = vmatpush1.msra.mxu0 0.0
  %1873 = vmatprep.subr.mxu0 0.0
  %1874 = vmatpush1.msra.mxu0 0.0
  %1875 = vmatprep.subr.mxu0 0.0
  %1876 = vmatpush1.msra.mxu0 0.0
  %1877 = vmatprep.subr.mxu0 0.0
  %1878 = vmatpush1.msra.mxu0 0.0
  %1879 = vmatprep.subr.mxu0 0.0
  %1880 = vmatpush1.msra.mxu0 0.0
  %1881 = vmatprep.subr.mxu0 0.0
  %1882 = vmatpush1.msra.mxu0 0.0
  %1883 = vmatprep.subr.mxu0 0.0
  %1884 = vmatpush1.msra.mxu0 0.0
  %1885 = vmatprep.subr.mxu0 0.0
  %1886 = vmatpush1.msra.mxu0 0.0
  %1887 = vmatprep.subr.mxu0 0.0
  %1888 = vmatpush1.msra.mxu0 0.0
  %1889 = vmatprep.subr.mxu0 0.0
  %1890 = vmatpush1.msra.mxu0 0.0
  %1891 = vmatprep.subr.mxu0 0.0
  %1892 = vmatpush1.msra.mxu0 0.0
  %1893 = vmatprep.subr.mxu0 0.0
  %1894 = vmatpush1.msra.mxu0 0.0
  %1895 = vmatprep.subr.mxu0 0.0
  %1896 = vmatpush1.msra.mxu0 0.0
  %1897 = vmatprep.subr.mxu0 0.0
  %1898 = vmatpush1.msra.mxu0 0.0
  %1899 = vmatprep.subr.mxu0 0.0
  %1900 = vmatpush1.msra.mxu0 0.0
  %1901 = vmatprep.subr.mxu0 0.0
  %1902 = vmatpush1.msra.mxu0 0.0
  %1903 = vmatprep.subr.mxu0 0.0
  %1904 = vmatpush1.msra.mxu0 0.0
  %1905 = vmatprep.subr.mxu0 0.0
  %1906 = vmatpush1.msra.mxu0 0.0
  %1907 = vmatprep.subr.mxu0 0.0
  %1908 = vmatpush1.msra.mxu0 0.0
  %1909 = vmatprep.subr.mxu0 0.0
  %1910 = vmatpush1.msra.mxu0 0.0
  %1911 = vmatprep.subr.mxu0 0.0
  %1912 = vmatpush1.msra.mxu0 0.0
  %1913 = vmatprep.subr.mxu0 0.0
  %1914 = vmatpush1.msra.mxu0 0.0
  %1915 = vmatprep.mubr.f32.mxu0 0.0
  %1916 = vmatmul.mubr.f32.gmra.mrb[0].mxu0 %v1849
  %v1917 = vpop.f32.mrb[0].mxu0
  %v1918 = vadd.f32 0.0, %v1917
  %v1919 = vpop.f32.mrb[0].mxu0
  %1920 = vdwg.mxu0
  %v1922 = vrot.slane %v1918, 3
  %v1923 = vrot.slane %v1918, 4
  %v1926 = vadd.f32 %v120, %v1922
  %v1927 = vadd.f32 %v130, %v1923
  %v1928 = vtanh.pop %v1926
  %v1929 = vtanh.pop %v1927
  %v1930 = vmul.f32 %v1928, %v142
  %v1931 = vmul.f32 %v1929, %v142
  %v1932 = vadd.f32 %v1930, %v143
  %v1933 = vadd.f32 %v1931, %v143
  %v1936 = vrot.slane %v1828, 7
  %v1937 = vrot.slane %v1829, 7
  %v1940 = vmul.f32 %v1932, %v1936
  %v1941 = vmul.f32 %v1933, %v1937
  %1944 = vrot.lane.b32.xlu0 %v1932, 64
  %v1945 = vpop.permute.xlu0 %1944
  %1946 = vrot.lane.b32.xlu0 %v1933, 64
  %v1947 = vpop.permute.xlu0 %1946
  %v1950 = vmul.f32 %v1932, %v1945
  %v1951 = vmul.f32 %v1933, %v1947
  %1954 = vrot.lane.b32.xlu0 %v1950, 32
  %v1955 = vpop.permute.xlu0 %1954
  %1956 = vrot.lane.b32.xlu0 %v1951, 32
  %v1957 = vpop.permute.xlu0 %1956
  %v1960 = vadd.f32 %v1940, %v1955
  %v1961 = vadd.f32 %v1941, %v1957
  %v1962 = vtanh.pop %v1960
  %v1963 = vtanh.pop %v1961
  %1966 = vrot.lane.b32.xlu0 %v1962, 64
  %v1967 = vpop.permute.xlu0 %1966
  %1968 = vrot.lane.b32.xlu0 %v1963, 64
  %v1969 = vpop.permute.xlu0 %1968
  %v1972 = vmul.f32 %v1932, %v1967
  %v1973 = vmul.f32 %v1933, %v1969
  %v1976 = vrot.slane %v1972, 5
  %v1977 = vrot.slane %v1973, 4
  %v1978 = vsel %vm267, %v1977, %v1976
  %1979 = vrot.lane.b32.xlu0 %v1978, 32
  %v1980 = vpop.permute.xlu0 %1979
  %v1981 = vsel %vm144, %v1980, 0
  %1983 = vmatprep.subr.mxu0 0.0
  %1984 = vmatpush1.msra.mxu0 %v133
  %1985 = vmatprep.subr.mxu0 0.0
  %1986 = vmatpush1.msra.mxu0 %v134
  %1987 = vmatprep.subr.mxu0 0.0
  %1988 = vmatpush1.msra.mxu0 %v135
  %1989 = vmatprep.subr.mxu0 0.0
  %1990 = vmatpush1.msra.mxu0 %v136
  %1991 = vmatprep.subr.mxu0 0.0
  %1992 = vmatpush1.msra.mxu0 0.0
  %1993 = vmatprep.subr.mxu0 0.0
  %1994 = vmatpush1.msra.mxu0 0.0
  %1995 = vmatprep.subr.mxu0 0.0
  %1996 = vmatpush1.msra.mxu0 0.0
  %1997 = vmatprep.subr.mxu0 0.0
  %1998 = vmatpush1.msra.mxu0 0.0
  %1999 = vmatprep.subr.mxu0 0.0
  %2000 = vmatpush1.msra.mxu0 0.0
  %2001 = vmatprep.subr.mxu0 0.0
  %2002 = vmatpush1.msra.mxu0 0.0
  %2003 = vmatprep.subr.mxu0 0.0
  %2004 = vmatpush1.msra.mxu0 0.0
  %2005 = vmatprep.subr.mxu0 0.0
  %2006 = vmatpush1.msra.mxu0 0.0
  %2007 = vmatprep.subr.mxu0 0.0
  %2008 = vmatpush1.msra.mxu0 0.0
  %2009 = vmatprep.subr.mxu0 0.0
  %2010 = vmatpush1.msra.mxu0 0.0
  %2011 = vmatprep.subr.mxu0 0.0
  %2012 = vmatpush1.msra.mxu0 0.0
  %2013 = vmatprep.subr.mxu0 0.0
  %2014 = vmatpush1.msra.mxu0 0.0
  %2015 = vmatprep.subr.mxu0 0.0
  %2016 = vmatpush1.msra.mxu0 0.0
  %2017 = vmatprep.subr.mxu0 0.0
  %2018 = vmatpush1.msra.mxu0 0.0
  %2019 = vmatprep.subr.mxu0 0.0
  %2020 = vmatpush1.msra.mxu0 0.0
  %2021 = vmatprep.subr.mxu0 0.0
  %2022 = vmatpush1.msra.mxu0 0.0
  %2023 = vmatprep.subr.mxu0 0.0
  %2024 = vmatpush1.msra.mxu0 0.0
  %2025 = vmatprep.subr.mxu0 0.0
  %2026 = vmatpush1.msra.mxu0 0.0
  %2027 = vmatprep.subr.mxu0 0.0
  %2028 = vmatpush1.msra.mxu0 0.0
  %2029 = vmatprep.subr.mxu0 0.0
  %2030 = vmatpush1.msra.mxu0 0.0
  %2031 = vmatprep.subr.mxu0 0.0
  %2032 = vmatpush1.msra.mxu0 0.0
  %2033 = vmatprep.subr.mxu0 0.0
  %2034 = vmatpush1.msra.mxu0 0.0
  %2035 = vmatprep.subr.mxu0 0.0
  %2036 = vmatpush1.msra.mxu0 0.0
  %2037 = vmatprep.subr.mxu0 0.0
  %2038 = vmatpush1.msra.mxu0 0.0
  %2039 = vmatprep.subr.mxu0 0.0
  %2040 = vmatpush1.msra.mxu0 0.0
  %2041 = vmatprep.subr.mxu0 0.0
  %2042 = vmatpush1.msra.mxu0 0.0
  %2043 = vmatprep.subr.mxu0 0.0
  %2044 = vmatpush1.msra.mxu0 0.0
  %2045 = vmatprep.subr.mxu0 0.0
  %2046 = vmatpush1.msra.mxu0 0.0
  %2047 = vmatprep.mubr.f32.mxu0 0.0
  %2048 = vmatmul.mubr.f32.gmra.mrb[0].mxu0 %v1981
  %v2049 = vpop.f32.mrb[0].mxu0
  %v2050 = vadd.f32 0.0, %v2049
  %v2051 = vpop.f32.mrb[0].mxu0
  %2052 = vdwg.mxu0
  %v2054 = vrot.slane %v2050, 2
  %v2055 = vrot.slane %v2050, 3
  %v2058 = vadd.f32 %v120, %v2054
  %v2059 = vadd.f32 %v130, %v2055
  %v2060 = vtanh.pop %v2058
  %v2061 = vtanh.pop %v2059
  %v2062 = vmul.f32 %v2060, %v142
  %v2063 = vmul.f32 %v2061, %v142
  %v2064 = vadd.f32 %v2062, %v143
  %v2065 = vadd.f32 %v2063, %v143
  %v2068 = vrot.slane %v1960, 7
  %v2069 = vrot.slane %v1961, 7
  %v2072 = vmul.f32 %v2064, %v2068
  %v2073 = vmul.f32 %v2065, %v2069
  %2076 = vrot.lane.b32.xlu0 %v2064, 64
  %v2077 = vpop.permute.xlu0 %2076
  %2078 = vrot.lane.b32.xlu0 %v2065, 64
  %v2079 = vpop.permute.xlu0 %2078
  %v2082 = vmul.f32 %v2064, %v2077
  %v2083 = vmul.f32 %v2065, %v2079
  %2086 = vrot.lane.b32.xlu0 %v2082, 32
  %v2087 = vpop.permute.xlu0 %2086
  %2088 = vrot.lane.b32.xlu0 %v2083, 32
  %v2089 = vpop.permute.xlu0 %2088
  %v2092 = vadd.f32 %v2072, %v2087
  %v2093 = vadd.f32 %v2073, %v2089
  %v2094 = vtanh.pop %v2092
  %v2095 = vtanh.pop %v2093
  %2098 = vrot.lane.b32.xlu0 %v2094, 64
  %v2099 = vpop.permute.xlu0 %2098
  %2100 = vrot.lane.b32.xlu0 %v2095, 64
  %v2101 = vpop.permute.xlu0 %2100
  %v2104 = vmul.f32 %v2064, %v2099
  %v2105 = vmul.f32 %v2065, %v2101
  %v2108 = vrot.slane %v2104, 6
  %v2109 = vrot.slane %v2105, 5
  %v2110 = vsel %vm267, %v2109, %v2108
  %2111 = vrot.lane.b32.xlu0 %v2110, 32
  %v2112 = vpop.permute.xlu0 %2111
  %v2113 = vsel %vm144, %v2112, 0
  %2115 = vmatprep.subr.mxu0 0.0
  %2116 = vmatpush1.msra.mxu0 %v133
  %2117 = vmatprep.subr.mxu0 0.0
  %2118 = vmatpush1.msra.mxu0 %v134
  %2119 = vmatprep.subr.mxu0 0.0
  %2120 = vmatpush1.msra.mxu0 %v135
  %2121 = vmatprep.subr.mxu0 0.0
  %2122 = vmatpush1.msra.mxu0 %v136
  %2123 = vmatprep.subr.mxu0 0.0
  %2124 = vmatpush1.msra.mxu0 0.0
  %2125 = vmatprep.subr.mxu0 0.0
  %2126 = vmatpush1.msra.mxu0 0.0
  %2127 = vmatprep.subr.mxu0 0.0
  %2128 = vmatpush1.msra.mxu0 0.0
  %2129 = vmatprep.subr.mxu0 0.0
  %2130 = vmatpush1.msra.mxu0 0.0
  %2131 = vmatprep.subr.mxu0 0.0
  %2132 = vmatpush1.msra.mxu0 0.0
  %2133 = vmatprep.subr.mxu0 0.0
  %2134 = vmatpush1.msra.mxu0 0.0
  %2135 = vmatprep.subr.mxu0 0.0
  %2136 = vmatpush1.msra.mxu0 0.0
  %2137 = vmatprep.subr.mxu0 0.0
  %2138 = vmatpush1.msra.mxu0 0.0
  %2139 = vmatprep.subr.mxu0 0.0
  %2140 = vmatpush1.msra.mxu0 0.0
  %2141 = vmatprep.subr.mxu0 0.0
  %2142 = vmatpush1.msra.mxu0 0.0
  %2143 = vmatprep.subr.mxu0 0.0
  %2144 = vmatpush1.msra.mxu0 0.0
  %2145 = vmatprep.subr.mxu0 0.0
  %2146 = vmatpush1.msra.mxu0 0.0
  %2147 = vmatprep.subr.mxu0 0.0
  %2148 = vmatpush1.msra.mxu0 0.0
  %2149 = vmatprep.subr.mxu0 0.0
  %2150 = vmatpush1.msra.mxu0 0.0
  %2151 = vmatprep.subr.mxu0 0.0
  %2152 = vmatpush1.msra.mxu0 0.0
  %2153 = vmatprep.subr.mxu0 0.0
  %2154 = vmatpush1.msra.mxu0 0.0
  %2155 = vmatprep.subr.mxu0 0.0
  %2156 = vmatpush1.msra.mxu0 0.0
  %2157 = vmatprep.subr.mxu0 0.0
  %2158 = vmatpush1.msra.mxu0 0.0
  %2159 = vmatprep.subr.mxu0 0.0
  %2160 = vmatpush1.msra.mxu0 0.0
  %2161 = vmatprep.subr.mxu0 0.0
  %2162 = vmatpush1.msra.mxu0 0.0
  %2163 = vmatprep.subr.mxu0 0.0
  %2164 = vmatpush1.msra.mxu0 0.0
  %2165 = vmatprep.subr.mxu0 0.0
  %2166 = vmatpush1.msra.mxu0 0.0
  %2167 = vmatprep.subr.mxu0 0.0
  %2168 = vmatpush1.msra.mxu0 0.0
  %2169 = vmatprep.subr.mxu0 0.0
  %2170 = vmatpush1.msra.mxu0 0.0
  %2171 = vmatprep.subr.mxu0 0.0
  %2172 = vmatpush1.msra.mxu0 0.0
  %2173 = vmatprep.subr.mxu0 0.0
  %2174 = vmatpush1.msra.mxu0 0.0
  %2175 = vmatprep.subr.mxu0 0.0
  %2176 = vmatpush1.msra.mxu0 0.0
  %2177 = vmatprep.subr.mxu0 0.0
  %2178 = vmatpush1.msra.mxu0 0.0
  %2179 = vmatprep.mubr.f32.mxu0 0.0
  %2180 = vmatmul.mubr.f32.gmra.mrb[0].mxu0 %v2113
  %v2181 = vpop.f32.mrb[0].mxu0
  %v2182 = vadd.f32 0.0, %v2181
  %v2183 = vpop.f32.mrb[0].mxu0
  %2184 = vdwg.mxu0
  %v2186 = vrot.slane %v2182, 1
  %v2187 = vrot.slane %v2182, 2
  %v2190 = vadd.f32 %v120, %v2186
  %v2191 = vadd.f32 %v130, %v2187
  %v2192 = vtanh.pop %v2190
  %v2193 = vtanh.pop %v2191
  %v2194 = vmul.f32 %v2192, %v142
  %v2195 = vmul.f32 %v2193, %v142
  %v2196 = vadd.f32 %v2194, %v143
  %v2197 = vadd.f32 %v2195, %v143
  %v2200 = vrot.slane %v2092, 7
  %v2201 = vrot.slane %v2093, 7
  %v2204 = vmul.f32 %v2196, %v2200
  %v2205 = vmul.f32 %v2197, %v2201
  %2208 = vrot.lane.b32.xlu0 %v2196, 64
  %v2209 = vpop.permute.xlu0 %2208
  %2210 = vrot.lane.b32.xlu0 %v2197, 64
  %v2211 = vpop.permute.xlu0 %2210
  %v2214 = vmul.f32 %v2196, %v2209
  %v2215 = vmul.f32 %v2197, %v2211
  %2218 = vrot.lane.b32.xlu0 %v2214, 32
  %v2219 = vpop.permute.xlu0 %2218
  %2220 = vrot.lane.b32.xlu0 %v2215, 32
  %v2221 = vpop.permute.xlu0 %2220
  %v2224 = vadd.f32 %v2204, %v2219
  %v2225 = vadd.f32 %v2205, %v2221
  %v2226 = vtanh.pop %v2224
  %v2227 = vtanh.pop %v2225
  %2230 = vrot.lane.b32.xlu0 %v2226, 64
  %v2231 = vpop.permute.xlu0 %2230
  %2232 = vrot.lane.b32.xlu0 %v2227, 64
  %v2233 = vpop.permute.xlu0 %2232
  %v2236 = vmul.f32 %v2196, %v2231
  %v2237 = vmul.f32 %v2197, %v2233
  %vm2238 = vcmask 1040384
  %v2239 = vsel %vm2238, %v262, %v393
  %v2240 = vsel %vm2238, %v263, %v394
  %vm2241 = vcmask 1041408
  %v2242 = vsel %vm2241, %v2239, %v524
  %v2243 = vsel %vm2241, %v2240, %v525
  %vm2244 = vcmask 1042432
  %v2245 = vsel %vm2244, %v2242, %v656
  %v2246 = vsel %vm2244, %v2243, %v657
  %vm2247 = vcmask 1043456
  %v2248 = vsel %vm2247, %v2245, %v788
  %v2249 = vsel %vm2247, %v2246, %v789
  %vm2250 = vcmask 1044480
  %v2251 = vsel %vm2250, %v2248, %v920
  %v2252 = vsel %vm2250, %v2249, %v921
  %vm2253 = vcmask 1045504
  %v2254 = vsel %vm2253, %v2251, %v1052
  %v2255 = vsel %vm2253, %v2252, %v1053
  %vm2256 = vcmask 1046528
  %v2257 = vsel %vm2256, %v2254, %v1184
  %v2258 = vsel %vm2256, %v2255, %v1185
  %v2259 = vsel %vm2238, %v1315, %v1445
  %v2260 = vsel %vm2238, %v1316, %v1446
  %v2261 = vsel %vm2241, %v2259, %v1576
  %v2262 = vsel %vm2241, %v2260, %v1577
  %v2263 = vsel %vm2244, %v2261, %v1708
  %v2264 = vsel %vm2244, %v2262, %v1709
  %v2265 = vsel %vm2247, %v2263, %v1840
  %v2266 = vsel %vm2247, %v2264, %v1841
  %v2267 = vsel %vm2250, %v2265, %v1972
  %v2268 = vsel %vm2250, %v2266, %v1973
  %v2269 = vsel %vm2253, %v2267, %v2104
  %v2270 = vsel %vm2253, %v2268, %v2105
  %v2271 = vsel %vm2256, %v2269, %v2236
  %v2272 = vsel %vm2256, %v2270, %v2237
  %v2273 = vld [vmem:[%s4] sm:$0xff]
  %v2274 = vld [vmem:[%s4 + $0x8] sm:$0xff]
  %v2275 = vld [vmem:[%s4 + $0x10] sm:$0xff]
  %v2276 = vld [vmem:[%s4 + $0x18] sm:$0xff]
  %v2277 = vld [vmem:[%s5] sm:$0x1]
  %v2279 = vlaneseq
  %v2280 = vshrl.u32 %v2279, 7
  %v2281 = vsub.s32 0, %v2280
  %v2282 = vrot.slane %v2277, %v2281
  %2288 = vrot.lane.b32.xlu0 %v2257, 32
  %v2289 = vpop.permute.xlu0 %2288
  %2290 = vrot.lane.b32.xlu0 %v2271, 32
  %v2291 = vpop.permute.xlu0 %2290
  %2292 = vrot.lane.b32.xlu0 %v2258, 32
  %v2293 = vpop.permute.xlu0 %2292
  %2294 = vrot.lane.b32.xlu0 %v2272, 32
  %v2295 = vpop.permute.xlu0 %2294
  %v2296 = vsel %vm144, %v2289, 0
  %v2298 = vsel %vm144, %v2291, 0
  %v2300 = vsel %vm144, %v2293, 0
  %v2302 = vsel %vm144, %v2295, 0
  %2304 = vmatprep.subr.mxu0 0.0
  %2305 = vmatpush1.msra.mxu0 %v2273
  %2306 = vmatprep.subr.mxu0 0.0
  %2307 = vmatpush1.msra.mxu0 %v2274
  %2308 = vmatprep.subr.mxu0 0.0
  %2309 = vmatpush1.msra.mxu0 %v2275
  %2310 = vmatprep.subr.mxu0 0.0
  %2311 = vmatpush1.msra.mxu0 %v2276
  %2312 = vmatprep.subr.mxu0 0.0
  %2313 = vmatpush1.msra.mxu0 0.0
  %2314 = vmatprep.subr.mxu0 0.0
  %2315 = vmatpush1.msra.mxu0 0.0
  %2316 = vmatprep.subr.mxu0 0.0
  %2317 = vmatpush1.msra.mxu0 0.0
  %2318 = vmatprep.subr.mxu0 0.0
  %2319 = vmatpush1.msra.mxu0 0.0
  %2320 = vmatprep.subr.mxu0 0.0
  %2321 = vmatpush1.msra.mxu0 0.0
  %2322 = vmatprep.subr.mxu0 0.0
  %2323 = vmatpush1.msra.mxu0 0.0
  %2324 = vmatprep.subr.mxu0 0.0
  %2325 = vmatpush1.msra.mxu0 0.0
  %2326 = vmatprep.subr.mxu0 0.0
  %2327 = vmatpush1.msra.mxu0 0.0
  %2328 = vmatprep.subr.mxu0 0.0
  %2329 = vmatpush1.msra.mxu0 0.0
  %2330 = vmatprep.subr.mxu0 0.0
  %2331 = vmatpush1.msra.mxu0 0.0
  %2332 = vmatprep.subr.mxu0 0.0
  %2333 = vmatpush1.msra.mxu0 0.0
  %2334 = vmatprep.subr.mxu0 0.0
  %2335 = vmatpush1.msra.mxu0 0.0
  %2336 = vmatprep.subr.mxu0 0.0
  %2337 = vmatpush1.msra.mxu0 0.0
  %2338 = vmatprep.subr.mxu0 0.0
  %2339 = vmatpush1.msra.mxu0 0.0
  %2340 = vmatprep.subr.mxu0 0.0
  %2341 = vmatpush1.msra.mxu0 0.0
  %2342 = vmatprep.subr.mxu0 0.0
  %2343 = vmatpush1.msra.mxu0 0.0
  %2344 = vmatprep.subr.mxu0 0.0
  %2345 = vmatpush1.msra.mxu0 0.0
  %2346 = vmatprep.subr.mxu0 0.0
  %2347 = vmatpush1.msra.mxu0 0.0
  %2348 = vmatprep.subr.mxu0 0.0
  %2349 = vmatpush1.msra.mxu0 0.0
  %2350 = vmatprep.subr.mxu0 0.0
  %2351 = vmatpush1.msra.mxu0 0.0
  %2352 = vmatprep.subr.mxu0 0.0
  %2353 = vmatpush1.msra.mxu0 0.0
  %2354 = vmatprep.subr.mxu0 0.0
  %2355 = vmatpush1.msra.mxu0 0.0
  %2356 = vmatprep.subr.mxu0 0.0
  %2357 = vmatpush1.msra.mxu0 0.0
  %2358 = vmatprep.subr.mxu0 0.0
  %2359 = vmatpush1.msra.mxu0 0.0
  %2360 = vmatprep.subr.mxu0 0.0
  %2361 = vmatpush1.msra.mxu0 0.0
  %2362 = vmatprep.subr.mxu0 0.0
  %2363 = vmatpush1.msra.mxu0 0.0
  %2364 = vmatprep.subr.mxu0 0.0
  %2365 = vmatpush1.msra.mxu0 0.0
  %2366 = vmatprep.subr.mxu0 0.0
  %2367 = vmatpush1.msra.mxu0 0.0
  %2368 = vmatprep.mubr.f32.mxu0 0.0
  %2369 = vmatmul.mubr.f32.gmra.mrb[0].mxu0 %v2296
  %v2370 = vpop.f32.mrb[0].mxu0
  %v2371 = vadd.f32 %v2282, %v2370
  %v2372 = vpop.f32.mrb[0].mxu0
  %2373 = vmatprep.mubr.f32.mxu0 0.0
  %2374 = vmatmul.mubr.f32.gmra.mrb[0].mxu0 %v2298
  %v2375 = vpop.f32.mrb[0].mxu0
  %v2376 = vadd.f32 %v2282, %v2375
  %v2377 = vpop.f32.mrb[0].mxu0
  %2378 = vmatprep.mubr.f32.mxu0 0.0
  %2379 = vmatmul.mubr.f32.gmra.mrb[0].mxu0 %v2300
  %v2380 = vpop.f32.mrb[0].mxu0
  %v2381 = vadd.f32 %v2282, %v2380
  %v2382 = vpop.f32.mrb[0].mxu0
  %2383 = vmatprep.mubr.f32.mxu0 0.0
  %2384 = vmatmul.mubr.f32.gmra.mrb[0].mxu0 %v2302
  %v2385 = vpop.f32.mrb[0].mxu0
  %v2386 = vadd.f32 %v2282, %v2385
  %v2387 = vpop.f32.mrb[0].mxu0
  %2388 = vdwg.mxu0
  %2389 = vst.msk [vmem:[%s6] sm:$0xff] %vm35, %v2371
  %2390 = vst.msk [vmem:[%s6 + $0x8] sm:$0xff] %vm35, %v2376
  %2391 = vst.msk [vmem:[%s6 + $0x10] sm:$0xff] %vm35, %v2381
  %2392 = vst.msk [vmem:[%s6 + $0x18] sm:$0xff] %vm35, %v2386
  // Predicated region
  $region26: #{tpu_custom_call.1} parent=0 // pred_check
    _
  $region27: #{tpu_custom_call.1} parent=0 // pred_check_branch
    %2394 = sbr.rel (0) target = $region29
  $region28: #{tpu_custom_call.1} parent=0 // pred_region
    _
  $region29: #{tpu_custom_call.1} parent=0 // pred_fallthru
    _
  // Predicated region
  $region30: #{tpu_custom_call.1} parent=0 // pred_check
    _
  $region31: #{tpu_custom_call.1} parent=0 // pred_check_branch
    %2396 = sbr.rel (0) target = $region33
  $region32: #{tpu_custom_call.1} parent=0 // pred_region
    _
  $region33: #{tpu_custom_call.1} parent=0 // pred_fallthru
    _

</llo_original>
